<compile_context>
chip_gen: v5e
topology: v5e:2x2
jax: 0.10.0
libtpu: 0.0.40
codegen_flags: <defaults>
</compile_context>

<pallas_src>
import functools
import math

import jax
import jax.numpy as jnp
from jax.experimental import pallas as pl
from jax.experimental.pallas import tpu as pltpu

# ------------------------- tiny synthetic BERT config -----------------------
VOCAB = 50          # vocab_size
TYPE_VOCAB = 2      # token_type vocab
MAX_POS = 16        # max position embeddings
BERT_H = 32         # bert hidden size
N_HEADS = 4
HEAD_D = BERT_H // N_HEADS
INTERMEDIATE = 64   # FFN intermediate size
N_LAYERS = 2        # args['num_bert_layers']
PROJ_H = 16         # TRADE `hidden_size` (self.proj output)
LN_EPS = 1e-12      # BertLayerNorm eps


# ------------------------------ kernel helpers -------------------------------
def _layer_norm(v, g, b):
    mu = jnp.mean(v, axis=-1, keepdims=True)
    var = jnp.mean(jnp.square(v - mu), axis=-1, keepdims=True)
    return (v - mu) * jax.lax.rsqrt(var + LN_EPS) * g + b


def _gelu_tanh(v):
    # BERT gelu, tanh approximation (tanh runs on the otherwise-idle EUP slot).
    c = math.sqrt(2.0 / math.pi)
    return 0.5 * v * (1.0 + jnp.tanh(c * (v + 0.044715 * (v * v * v))))


# --------------------------- fused encoder kernel ----------------------------
def _encoder_kernel(emb_ref, mask_ref,
                    emb_ln_g_ref, emb_ln_b_ref,
                    qkv_w_ref, qkv_b_ref,
                    ao_w_ref, ao_b_ref, ao_ln_g_ref, ao_ln_b_ref,
                    ff_i_w_ref, ff_i_b_ref,
                    ff_o_w_ref, ff_o_b_ref, ff_ln_g_ref, ff_ln_b_ref,
                    pool_w_ref, pool_b_ref,
                    proj_w_ref, proj_b_ref,
                    out_ref, hid_ref):
    # One grid step == one batch element; everything stays VMEM-resident.
    x = emb_ref[...]                                   # (S, H)
    bias = mask_ref[...]                               # (1, S) additive mask

    # --- BertEmbeddings LayerNorm --------------------------------------------
    x = _layer_norm(x, emb_ln_g_ref[...], emb_ln_b_ref[...])

    scale = 1.0 / math.sqrt(HEAD_D)

    # --- BertEncoder layers (static Python unroll, N_LAYERS = 2) -------------
    for l in range(N_LAYERS):
        # fused QKV projection: one (S, H) x (H, 3H) matmul
        qkv = (jnp.dot(x, qkv_w_ref[l], preferred_element_type=jnp.float32)
               + qkv_b_ref[l])                         # (S, 3H)

        # per-head attention with static slices (no cross-call transposes)
        ctx_heads = []
        for h in range(N_HEADS):
            lo = h * HEAD_D
            q_h = qkv[:, lo:lo + HEAD_D]                           # (S, dH)
            k_h = qkv[:, BERT_H + lo:BERT_H + lo + HEAD_D]         # (S, dH)
            v_h = qkv[:, 2 * BERT_H + lo:2 * BERT_H + lo + HEAD_D]  # (S, dH)

            # q @ k^T via dot_general (contract on dH, no explicit transpose)
            s = jax.lax.dot_general(
                q_h, k_h, (((1,), (1,)), ((), ())),
                preferred_element_type=jnp.float32) * scale + bias  # (S, S)

            s = s - jnp.max(s, axis=-1, keepdims=True)              # stable
            p = jnp.exp(s)
            inv_den = pl.reciprocal(jnp.sum(p, axis=-1, keepdims=True),
                                    approx=True)
            p = p * inv_den
            ctx_heads.append(
                jnp.dot(p, v_h, preferred_element_type=jnp.float32))
        ctx = jnp.concatenate(ctx_heads, axis=-1)                   # (S, H)

        # attention output projection + residual + LayerNorm
        attn_out = (jnp.dot(ctx, ao_w_ref[l],
                            preferred_element_type=jnp.float32)
                    + ao_b_ref[l])
        x = _layer_norm(attn_out + x, ao_ln_g_ref[l], ao_ln_b_ref[l])

        # feed-forward (gelu) + residual + LayerNorm
        inter = _gelu_tanh(
            jnp.dot(x, ff_i_w_ref[l], preferred_element_type=jnp.float32)
            + ff_i_b_ref[l])                                        # (S, I)
        ff_out = (jnp.dot(inter, ff_o_w_ref[l],
                          preferred_element_type=jnp.float32)
                  + ff_o_b_ref[l])
        x = _layer_norm(ff_out + x, ff_ln_g_ref[l], ff_ln_b_ref[l])

    # --- BertPooler: tanh(dense(first token)) ---------------------------------
    first = x[0:1, :]                                               # (1, H)
    pooled = jnp.tanh(
        jnp.dot(first, pool_w_ref[...], preferred_element_type=jnp.float32)
        + pool_b_ref[...])                                          # (1, H)

    # --- TRADE projection applied to sequence output and pooled output -------
    proj_w = proj_w_ref[...]
    proj_b = proj_b_ref[...]
    out_ref[...] = (jnp.dot(x, proj_w, preferred_element_type=jnp.float32)
                    + proj_b).astype(out_ref.dtype)                 # (S, P)
    hid_ref[...] = (jnp.dot(pooled, proj_w, preferred_element_type=jnp.float32)
                    + proj_b).astype(hid_ref.dtype)                 # (1, P)


# --------------------------------- parameters ---------------------------------
def init_params(key):
    # TODO(synk): original module loads pretrained BERT weights; here they are
    # deterministic synthetic tensors of the same shapes (QKV pre-concatenated).
    kit = iter(jax.random.split(key, 64))

    def w(shape):
        return 0.02 * jax.random.normal(next(kit), shape, dtype=jnp.float32)

    def zeros(shape):
        return jnp.zeros(shape, jnp.float32)

    def ones(shape):
        return jnp.ones(shape, jnp.float32)

    L, H, I, P = N_LAYERS, BERT_H, INTERMEDIATE, PROJ_H
    return {
        "word_emb": w((VOCAB, H)),
        "pos_emb": w((MAX_POS, H)),
        "tok_emb": w((TYPE_VOCAB, H)),
        "emb_ln_g": ones((1, H)), "emb_ln_b": zeros((1, H)),
        # per-layer weights stacked along a leading layer axis
        "qkv_w": w((L, H, 3 * H)), "qkv_b": zeros((L, 1, 3 * H)),
        "ao_w": w((L, H, H)), "ao_b": zeros((L, 1, H)),
        "ao_ln_g": ones((L, 1, H)), "ao_ln_b": zeros((L, 1, H)),
        "ff_i_w": w((L, H, I)), "ff_i_b": zeros((L, 1, I)),
        "ff_o_w": w((L, I, H)), "ff_o_b": zeros((L, 1, H)),
        "ff_ln_g": ones((L, 1, H)), "ff_ln_b": zeros((L, 1, H)),
        "pool_w": w((H, H)), "pool_b": zeros((1, H)),
        "proj_w": w((H, P)), "proj_b": zeros((1, P)),
    }


# ---------------------------------- forward -----------------------------------
def bert_encoder_forward(params, all_input_ids, all_input_mask,
                         all_segment_ids, all_sub_word_masks=None):
    # all_sub_word_masks is accepted but unused (matches the PyTorch forward).
    del all_sub_word_masks
    B, S = all_input_ids.shape
    H, I, P, L = BERT_H, INTERMEDIATE, PROJ_H, N_LAYERS

    # --- BertEmbeddings lookups (tiny gathers, kept in XLA) -------------------
    pos = jnp.arange(S)
    emb = (params["word_emb"][all_input_ids]
           + params["pos_emb"][pos][None, :, :]
           + params["tok_emb"][all_segment_ids])                    # (B, S, H)

    # extended attention mask: (1 - mask) * -10000, broadcast over heads / q
    mask_bias = ((1.0 - all_input_mask.astype(jnp.float32))
                 * -10000.0).reshape(B, 1, S)

    def full_spec(shape):
        n = len(shape)
        return pl.BlockSpec(shape, lambda b, n=n: (0,) * n)

    in_specs = [
        pl.BlockSpec((None, S, H), lambda b: (b, 0, 0)),            # emb
        pl.BlockSpec((None, 1, S), lambda b: (b, 0, 0)),            # mask bias
        full_spec((1, H)), full_spec((1, H)),                       # emb LN
        full_spec((L, H, 3 * H)), full_spec((L, 1, 3 * H)),         # fused QKV
        full_spec((L, H, H)), full_spec((L, 1, H)),                 # attn out
        full_spec((L, 1, H)), full_spec((L, 1, H)),                 # attn LN
        full_spec((L, H, I)), full_spec((L, 1, I)),                 # FFN in
        full_spec((L, I, H)), full_spec((L, 1, H)),                 # FFN out
        full_spec((L, 1, H)), full_spec((L, 1, H)),                 # FFN LN
        full_spec((H, H)), full_spec((1, H)),                       # pooler
        full_spec((H, P)), full_spec((1, P)),                       # proj
    ]
    out_specs = [
        pl.BlockSpec((None, S, P), lambda b: (b, 0, 0)),            # output
        pl.BlockSpec((None, 1, P), lambda b: (b, 0, 0)),            # hidden
    ]

    output, hidden = pl.pallas_call(
        _encoder_kernel,
        out_shape=(jax.ShapeDtypeStruct((B, S, P), jnp.float32),
                   jax.ShapeDtypeStruct((B, 1, P), jnp.float32)),
        grid=(B,),
        in_specs=in_specs,
        out_specs=out_specs,
        compiler_params=pltpu.CompilerParams(
            dimension_semantics=("parallel",)),
    )(emb, mask_bias,
      params["emb_ln_g"], params["emb_ln_b"],
      params["qkv_w"], params["qkv_b"],
      params["ao_w"], params["ao_b"], params["ao_ln_g"], params["ao_ln_b"],
      params["ff_i_w"], params["ff_i_b"],
      params["ff_o_w"], params["ff_o_b"], params["ff_ln_g"], params["ff_ln_b"],
      params["pool_w"], params["pool_b"],
      params["proj_w"], params["proj_b"])

    return output, hidden.reshape(B, P)


# ------------------------------------ main ------------------------------------
if __name__ == "__main__":
    B, S = 2, 8
    key = jax.random.PRNGKey(0)
    k_ids, k_par = jax.random.split(key, 2)

    all_input_ids = jax.random.randint(k_ids, (B, S), 0, VOCAB, dtype=jnp.int32)
    lengths = jnp.array([S, S - 2], dtype=jnp.int32)
    all_input_mask = (jnp.arange(S)[None, :] < lengths[:, None]).astype(jnp.int32)
    all_segment_ids = jnp.tile(
        jnp.concatenate([jnp.zeros((S // 2,), jnp.int32),
                         jnp.ones((S - S // 2,), jnp.int32)])[None, :], (B, 1))
    all_sub_word_masks = jnp.ones((B, S), jnp.int32)

    params = init_params(k_par)

    fwd = jax.jit(bert_encoder_forward)
    output, hidden = fwd(params, all_input_ids, all_input_mask,
                         all_segment_ids, all_sub_word_masks)
    jax.block_until_ready((output, hidden))

    assert output.shape == (B, S, PROJ_H) and output.dtype == jnp.float32
    assert hidden.shape == (B, PROJ_H) and hidden.dtype == jnp.float32
    assert bool(jnp.all(jnp.isfinite(output))) and bool(jnp.all(jnp.isfinite(hidden)))
    print("KERNEL_OK")
</pallas_src>

<mosaic_0001>
module attributes {stable_mosaic.version = 11 : i64} {
  func.func @_encoder_kernel(%arg0: i32, %arg1: memref<1x8x32xf32, #tpu.memory_space<vmem>>, %arg2: memref<1x1x8xf32, #tpu.memory_space<vmem>>, %arg3: memref<1x32xf32, #tpu.memory_space<vmem>>, %arg4: memref<1x32xf32, #tpu.memory_space<vmem>>, %arg5: memref<2x32x96xf32, #tpu.memory_space<vmem>>, %arg6: memref<2x1x96xf32, #tpu.memory_space<vmem>>, %arg7: memref<2x32x32xf32, #tpu.memory_space<vmem>>, %arg8: memref<2x1x32xf32, #tpu.memory_space<vmem>>, %arg9: memref<2x1x32xf32, #tpu.memory_space<vmem>>, %arg10: memref<2x1x32xf32, #tpu.memory_space<vmem>>, %arg11: memref<2x32x64xf32, #tpu.memory_space<vmem>>, %arg12: memref<2x1x64xf32, #tpu.memory_space<vmem>>, %arg13: memref<2x64x32xf32, #tpu.memory_space<vmem>>, %arg14: memref<2x1x32xf32, #tpu.memory_space<vmem>>, %arg15: memref<2x1x32xf32, #tpu.memory_space<vmem>>, %arg16: memref<2x1x32xf32, #tpu.memory_space<vmem>>, %arg17: memref<32x32xf32, #tpu.memory_space<vmem>>, %arg18: memref<1x32xf32, #tpu.memory_space<vmem>>, %arg19: memref<32x16xf32, #tpu.memory_space<vmem>>, %arg20: memref<1x16xf32, #tpu.memory_space<vmem>>, %arg21: memref<1x8x16xf32, #tpu.memory_space<vmem>>, %arg22: memref<1x1x16xf32, #tpu.memory_space<vmem>>) attributes {dimension_semantics = [#tpu.dimension_semantics<parallel>], iteration_bounds = array<i64: 2>, scalar_prefetch = 0 : i64, scratch_operands = 0 : i64, tpu.core_type = #tpu.core_type<tc>, window_params = [{transform_indices = @transform_0, window_bounds = array<i64: 1, 8, 32>}, {transform_indices = @transform_1, window_bounds = array<i64: 1, 1, 8>}, {pipeline_mode = #tpu.pipeline_mode<synchronous>, transform_indices = @transform_2, window_bounds = array<i64: 1, 32>}, {pipeline_mode = #tpu.pipeline_mode<synchronous>, transform_indices = @transform_3, window_bounds = array<i64: 1, 32>}, {pipeline_mode = #tpu.pipeline_mode<synchronous>, transform_indices = @transform_4, window_bounds = array<i64: 2, 32, 96>}, {pipeline_mode = #tpu.pipeline_mode<synchronous>, transform_indices = @transform_5, window_bounds = array<i64: 2, 1, 96>}, {pipeline_mode = #tpu.pipeline_mode<synchronous>, transform_indices = @transform_6, window_bounds = array<i64: 2, 32, 32>}, {pipeline_mode = #tpu.pipeline_mode<synchronous>, transform_indices = @transform_7, window_bounds = array<i64: 2, 1, 32>}, {pipeline_mode = #tpu.pipeline_mode<synchronous>, transform_indices = @transform_8, window_bounds = array<i64: 2, 1, 32>}, {pipeline_mode = #tpu.pipeline_mode<synchronous>, transform_indices = @transform_9, window_bounds = array<i64: 2, 1, 32>}, {pipeline_mode = #tpu.pipeline_mode<synchronous>, transform_indices = @transform_10, window_bounds = array<i64: 2, 32, 64>}, {pipeline_mode = #tpu.pipeline_mode<synchronous>, transform_indices = @transform_11, window_bounds = array<i64: 2, 1, 64>}, {pipeline_mode = #tpu.pipeline_mode<synchronous>, transform_indices = @transform_12, window_bounds = array<i64: 2, 64, 32>}, {pipeline_mode = #tpu.pipeline_mode<synchronous>, transform_indices = @transform_13, window_bounds = array<i64: 2, 1, 32>}, {pipeline_mode = #tpu.pipeline_mode<synchronous>, transform_indices = @transform_14, window_bounds = array<i64: 2, 1, 32>}, {pipeline_mode = #tpu.pipeline_mode<synchronous>, transform_indices = @transform_15, window_bounds = array<i64: 2, 1, 32>}, {pipeline_mode = #tpu.pipeline_mode<synchronous>, transform_indices = @transform_16, window_bounds = array<i64: 32, 32>}, {pipeline_mode = #tpu.pipeline_mode<synchronous>, transform_indices = @transform_17, window_bounds = array<i64: 1, 32>}, {pipeline_mode = #tpu.pipeline_mode<synchronous>, transform_indices = @transform_18, window_bounds = array<i64: 32, 16>}, {pipeline_mode = #tpu.pipeline_mode<synchronous>, transform_indices = @transform_19, window_bounds = array<i64: 1, 16>}, {transform_indices = @transform_20, window_bounds = array<i64: 1, 8, 16>}, {transform_indices = @transform_21, window_bounds = array<i64: 1, 1, 16>}]} {
    %c0 = arith.constant 0 : index
    %c0_0 = arith.constant 0 : index
    %c0_1 = arith.constant 0 : index
    %0 = vector.load %arg1[%c0, %c0_0, %c0_1] : memref<1x8x32xf32, #tpu.memory_space<vmem>>, vector<1x8x32xf32>
    %1 = vector.shape_cast %0 : vector<1x8x32xf32> to vector<8x32xf32>
    %c0_2 = arith.constant 0 : index
    %c0_3 = arith.constant 0 : index
    %c0_4 = arith.constant 0 : index
    %2 = vector.load %arg2[%c0_2, %c0_3, %c0_4] : memref<1x1x8xf32, #tpu.memory_space<vmem>>, vector<1x1x8xf32>
    %3 = vector.shape_cast %2 : vector<1x1x8xf32> to vector<1x8xf32>
    %c0_5 = arith.constant 0 : index
    %c0_6 = arith.constant 0 : index
    %4 = vector.load %arg3[%c0_5, %c0_6] : memref<1x32xf32, #tpu.memory_space<vmem>>, vector<1x32xf32>
    %c0_7 = arith.constant 0 : index
    %c0_8 = arith.constant 0 : index
    %5 = vector.load %arg4[%c0_7, %c0_8] : memref<1x32xf32, #tpu.memory_space<vmem>>, vector<1x32xf32>
    %cst = arith.constant dense<0.000000e+00> : vector<8xf32>
    %6 = vector.multi_reduction <add>, %1, %cst [1] : vector<8x32xf32> to vector<8xf32>
    %7 = vector.shape_cast %6 : vector<8xf32> to vector<8x1xf32>
    %cst_9 = arith.constant 3.200000e+01 : f32
    %8 = vector.broadcast %cst_9 : f32 to vector<8x1xf32>
    %9 = arith.divf %7, %8 : vector<8x1xf32>
    %10 = vector.broadcast %9 : vector<8x1xf32> to vector<8x32xf32>
    %11 = arith.subf %1, %10 : vector<8x32xf32>
    %12 = arith.mulf %11, %11 : vector<8x32xf32>
    %cst_10 = arith.constant dense<0.000000e+00> : vector<8xf32>
    %13 = vector.multi_reduction <add>, %12, %cst_10 [1] : vector<8x32xf32> to vector<8xf32>
    %14 = vector.shape_cast %13 : vector<8xf32> to vector<8x1xf32>
    %cst_11 = arith.constant 3.200000e+01 : f32
    %15 = vector.broadcast %cst_11 : f32 to vector<8x1xf32>
    %16 = arith.divf %14, %15 : vector<8x1xf32>
    %17 = vector.broadcast %9 : vector<8x1xf32> to vector<8x32xf32>
    %18 = arith.subf %1, %17 : vector<8x32xf32>
    %cst_12 = arith.constant 9.99999996E-13 : f32
    %19 = vector.broadcast %cst_12 : f32 to vector<8x1xf32>
    %20 = arith.addf %16, %19 : vector<8x1xf32>
    %21 = math.rsqrt %20 : vector<8x1xf32>
    %22 = vector.broadcast %21 : vector<8x1xf32> to vector<8x32xf32>
    %23 = arith.mulf %18, %22 : vector<8x32xf32>
    %24 = vector.broadcast %4 : vector<1x32xf32> to vector<8x32xf32>
    %25 = arith.mulf %23, %24 : vector<8x32xf32>
    %26 = vector.broadcast %5 : vector<1x32xf32> to vector<8x32xf32>
    %27 = arith.addf %25, %26 : vector<8x32xf32>
    %c0_13 = arith.constant 0 : index
    %c0_14 = arith.constant 0 : index
    %c0_15 = arith.constant 0 : index
    %28 = vector.load %arg5[%c0_13, %c0_14, %c0_15] : memref<2x32x96xf32, #tpu.memory_space<vmem>>, vector<1x32x96xf32>
    %29 = vector.shape_cast %28 : vector<1x32x96xf32> to vector<32x96xf32>
    %cst_16 = arith.constant dense<0.000000e+00> : vector<8x96xf32>
    %30 = tpu.matmul %27, %29, %cst_16 {dimension_numbers = #tpu.dot_dimension_numbers<[1], [0], [0], [1], [0, 0, 1, 1], [], []>} : vector<8x32xf32>, vector<32x96xf32>, vector<8x96xf32> -> vector<8x96xf32>
    %c0_17 = arith.constant 0 : index
    %c0_18 = arith.constant 0 : index
    %c0_19 = arith.constant 0 : index
    %31 = vector.load %arg6[%c0_17, %c0_18, %c0_19] : memref<2x1x96xf32, #tpu.memory_space<vmem>>, vector<1x1x96xf32>
    %32 = vector.shape_cast %31 : vector<1x1x96xf32> to vector<1x96xf32>
    %33 = vector.broadcast %32 : vector<1x96xf32> to vector<8x96xf32>
    %34 = arith.addf %30, %33 : vector<8x96xf32>
    %35 = vector.extract_strided_slice %34 {offsets = [0, 0], sizes = [8, 8], strides = [1, 1]} : vector<8x96xf32> to vector<8x8xf32>
    %36 = vector.extract_strided_slice %34 {offsets = [0, 32], sizes = [8, 8], strides = [1, 1]} : vector<8x96xf32> to vector<8x8xf32>
    %37 = vector.extract_strided_slice %34 {offsets = [0, 64], sizes = [8, 8], strides = [1, 1]} : vector<8x96xf32> to vector<8x8xf32>
    %cst_20 = arith.constant dense<0.000000e+00> : vector<8x8xf32>
    %38 = tpu.matmul %35, %36, %cst_20 {dimension_numbers = #tpu.dot_dimension_numbers<[1], [1], [0], [0], [0, 0, 1, 0], [], []>} : vector<8x8xf32>, vector<8x8xf32>, vector<8x8xf32> -> vector<8x8xf32>
    %cst_21 = arith.constant 0.353553385 : f32
    %39 = vector.broadcast %cst_21 : f32 to vector<8x8xf32>
    %40 = arith.mulf %38, %39 : vector<8x8xf32>
    %41 = vector.broadcast %3 : vector<1x8xf32> to vector<8x8xf32>
    %42 = arith.addf %40, %41 : vector<8x8xf32>
    %cst_22 = arith.constant dense<0xFF800000> : vector<8xf32>
    %43 = vector.multi_reduction <maximumf>, %42, %cst_22 [1] : vector<8x8xf32> to vector<8xf32>
    %44 = vector.shape_cast %43 : vector<8xf32> to vector<8x1xf32>
    %45 = vector.broadcast %44 : vector<8x1xf32> to vector<8x8xf32>
    %46 = arith.subf %42, %45 : vector<8x8xf32>
    %47 = math.exp %46 : vector<8x8xf32>
    %cst_23 = arith.constant dense<0.000000e+00> : vector<8xf32>
    %48 = vector.multi_reduction <add>, %47, %cst_23 [1] : vector<8x8xf32> to vector<8xf32>
    %49 = vector.shape_cast %48 : vector<8xf32> to vector<8x1xf32>
    %50 = tpu.reciprocal %49 {approx = true} : vector<8x1xf32> -> vector<8x1xf32>
    %51 = vector.broadcast %50 : vector<8x1xf32> to vector<8x8xf32>
    %52 = arith.mulf %47, %51 : vector<8x8xf32>
    %cst_24 = arith.constant dense<0.000000e+00> : vector<8x8xf32>
    %53 = tpu.matmul %52, %37, %cst_24 {dimension_numbers = #tpu.dot_dimension_numbers<[1], [0], [0], [1], [0, 0, 1, 1], [], []>} : vector<8x8xf32>, vector<8x8xf32>, vector<8x8xf32> -> vector<8x8xf32>
    %54 = vector.extract_strided_slice %34 {offsets = [0, 8], sizes = [8, 8], strides = [1, 1]} : vector<8x96xf32> to vector<8x8xf32>
    %55 = vector.extract_strided_slice %34 {offsets = [0, 40], sizes = [8, 8], strides = [1, 1]} : vector<8x96xf32> to vector<8x8xf32>
    %56 = vector.extract_strided_slice %34 {offsets = [0, 72], sizes = [8, 8], strides = [1, 1]} : vector<8x96xf32> to vector<8x8xf32>
    %cst_25 = arith.constant dense<0.000000e+00> : vector<8x8xf32>
    %57 = tpu.matmul %54, %55, %cst_25 {dimension_numbers = #tpu.dot_dimension_numbers<[1], [1], [0], [0], [0, 0, 1, 0], [], []>} : vector<8x8xf32>, vector<8x8xf32>, vector<8x8xf32> -> vector<8x8xf32>
    %cst_26 = arith.constant 0.353553385 : f32
    %58 = vector.broadcast %cst_26 : f32 to vector<8x8xf32>
    %59 = arith.mulf %57, %58 : vector<8x8xf32>
    %60 = vector.broadcast %3 : vector<1x8xf32> to vector<8x8xf32>
    %61 = arith.addf %59, %60 : vector<8x8xf32>
    %cst_27 = arith.constant dense<0xFF800000> : vector<8xf32>
    %62 = vector.multi_reduction <maximumf>, %61, %cst_27 [1] : vector<8x8xf32> to vector<8xf32>
    %63 = vector.shape_cast %62 : vector<8xf32> to vector<8x1xf32>
    %64 = vector.broadcast %63 : vector<8x1xf32> to vector<8x8xf32>
    %65 = arith.subf %61, %64 : vector<8x8xf32>
    %66 = math.exp %65 : vector<8x8xf32>
    %cst_28 = arith.constant dense<0.000000e+00> : vector<8xf32>
    %67 = vector.multi_reduction <add>, %66, %cst_28 [1] : vector<8x8xf32> to vector<8xf32>
    %68 = vector.shape_cast %67 : vector<8xf32> to vector<8x1xf32>
    %69 = tpu.reciprocal %68 {approx = true} : vector<8x1xf32> -> vector<8x1xf32>
    %70 = vector.broadcast %69 : vector<8x1xf32> to vector<8x8xf32>
    %71 = arith.mulf %66, %70 : vector<8x8xf32>
    %cst_29 = arith.constant dense<0.000000e+00> : vector<8x8xf32>
    %72 = tpu.matmul %71, %56, %cst_29 {dimension_numbers = #tpu.dot_dimension_numbers<[1], [0], [0], [1], [0, 0, 1, 1], [], []>} : vector<8x8xf32>, vector<8x8xf32>, vector<8x8xf32> -> vector<8x8xf32>
    %73 = vector.extract_strided_slice %34 {offsets = [0, 16], sizes = [8, 8], strides = [1, 1]} : vector<8x96xf32> to vector<8x8xf32>
    %74 = vector.extract_strided_slice %34 {offsets = [0, 48], sizes = [8, 8], strides = [1, 1]} : vector<8x96xf32> to vector<8x8xf32>
    %75 = vector.extract_strided_slice %34 {offsets = [0, 80], sizes = [8, 8], strides = [1, 1]} : vector<8x96xf32> to vector<8x8xf32>
    %cst_30 = arith.constant dense<0.000000e+00> : vector<8x8xf32>
    %76 = tpu.matmul %73, %74, %cst_30 {dimension_numbers = #tpu.dot_dimension_numbers<[1], [1], [0], [0], [0, 0, 1, 0], [], []>} : vector<8x8xf32>, vector<8x8xf32>, vector<8x8xf32> -> vector<8x8xf32>
    %cst_31 = arith.constant 0.353553385 : f32
    %77 = vector.broadcast %cst_31 : f32 to vector<8x8xf32>
    %78 = arith.mulf %76, %77 : vector<8x8xf32>
    %79 = vector.broadcast %3 : vector<1x8xf32> to vector<8x8xf32>
    %80 = arith.addf %78, %79 : vector<8x8xf32>
    %cst_32 = arith.constant dense<0xFF800000> : vector<8xf32>
    %81 = vector.multi_reduction <maximumf>, %80, %cst_32 [1] : vector<8x8xf32> to vector<8xf32>
    %82 = vector.shape_cast %81 : vector<8xf32> to vector<8x1xf32>
    %83 = vector.broadcast %82 : vector<8x1xf32> to vector<8x8xf32>
    %84 = arith.subf %80, %83 : vector<8x8xf32>
    %85 = math.exp %84 : vector<8x8xf32>
    %cst_33 = arith.constant dense<0.000000e+00> : vector<8xf32>
    %86 = vector.multi_reduction <add>, %85, %cst_33 [1] : vector<8x8xf32> to vector<8xf32>
    %87 = vector.shape_cast %86 : vector<8xf32> to vector<8x1xf32>
    %88 = tpu.reciprocal %87 {approx = true} : vector<8x1xf32> -> vector<8x1xf32>
    %89 = vector.broadcast %88 : vector<8x1xf32> to vector<8x8xf32>
    %90 = arith.mulf %85, %89 : vector<8x8xf32>
    %cst_34 = arith.constant dense<0.000000e+00> : vector<8x8xf32>
    %91 = tpu.matmul %90, %75, %cst_34 {dimension_numbers = #tpu.dot_dimension_numbers<[1], [0], [0], [1], [0, 0, 1, 1], [], []>} : vector<8x8xf32>, vector<8x8xf32>, vector<8x8xf32> -> vector<8x8xf32>
    %92 = vector.extract_strided_slice %34 {offsets = [0, 24], sizes = [8, 8], strides = [1, 1]} : vector<8x96xf32> to vector<8x8xf32>
    %93 = vector.extract_strided_slice %34 {offsets = [0, 56], sizes = [8, 8], strides = [1, 1]} : vector<8x96xf32> to vector<8x8xf32>
    %94 = vector.extract_strided_slice %34 {offsets = [0, 88], sizes = [8, 8], strides = [1, 1]} : vector<8x96xf32> to vector<8x8xf32>
    %cst_35 = arith.constant dense<0.000000e+00> : vector<8x8xf32>
    %95 = tpu.matmul %92, %93, %cst_35 {dimension_numbers = #tpu.dot_dimension_numbers<[1], [1], [0], [0], [0, 0, 1, 0], [], []>} : vector<8x8xf32>, vector<8x8xf32>, vector<8x8xf32> -> vector<8x8xf32>
    %cst_36 = arith.constant 0.353553385 : f32
    %96 = vector.broadcast %cst_36 : f32 to vector<8x8xf32>
    %97 = arith.mulf %95, %96 : vector<8x8xf32>
    %98 = vector.broadcast %3 : vector<1x8xf32> to vector<8x8xf32>
    %99 = arith.addf %97, %98 : vector<8x8xf32>
    %cst_37 = arith.constant dense<0xFF800000> : vector<8xf32>
    %100 = vector.multi_reduction <maximumf>, %99, %cst_37 [1] : vector<8x8xf32> to vector<8xf32>
    %101 = vector.shape_cast %100 : vector<8xf32> to vector<8x1xf32>
    %102 = vector.broadcast %101 : vector<8x1xf32> to vector<8x8xf32>
    %103 = arith.subf %99, %102 : vector<8x8xf32>
    %104 = math.exp %103 : vector<8x8xf32>
    %cst_38 = arith.constant dense<0.000000e+00> : vector<8xf32>
    %105 = vector.multi_reduction <add>, %104, %cst_38 [1] : vector<8x8xf32> to vector<8xf32>
    %106 = vector.shape_cast %105 : vector<8xf32> to vector<8x1xf32>
    %107 = tpu.reciprocal %106 {approx = true} : vector<8x1xf32> -> vector<8x1xf32>
    %108 = vector.broadcast %107 : vector<8x1xf32> to vector<8x8xf32>
    %109 = arith.mulf %104, %108 : vector<8x8xf32>
    %cst_39 = arith.constant dense<0.000000e+00> : vector<8x8xf32>
    %110 = tpu.matmul %109, %94, %cst_39 {dimension_numbers = #tpu.dot_dimension_numbers<[1], [0], [0], [1], [0, 0, 1, 1], [], []>} : vector<8x8xf32>, vector<8x8xf32>, vector<8x8xf32> -> vector<8x8xf32>
    %111 = tpu.concatenate %53, %72, %91, %110 in 1 : vector<8x8xf32>, vector<8x8xf32>, vector<8x8xf32>, vector<8x8xf32> -> vector<8x32xf32>
    %c0_40 = arith.constant 0 : index
    %c0_41 = arith.constant 0 : index
    %c0_42 = arith.constant 0 : index
    %112 = vector.load %arg7[%c0_40, %c0_41, %c0_42] : memref<2x32x32xf32, #tpu.memory_space<vmem>>, vector<1x32x32xf32>
    %113 = vector.shape_cast %112 : vector<1x32x32xf32> to vector<32x32xf32>
    %cst_43 = arith.constant dense<0.000000e+00> : vector<8x32xf32>
    %114 = tpu.matmul %111, %113, %cst_43 {dimension_numbers = #tpu.dot_dimension_numbers<[1], [0], [0], [1], [0, 0, 1, 1], [], []>} : vector<8x32xf32>, vector<32x32xf32>, vector<8x32xf32> -> vector<8x32xf32>
    %c0_44 = arith.constant 0 : index
    %c0_45 = arith.constant 0 : index
    %c0_46 = arith.constant 0 : index
    %115 = vector.load %arg8[%c0_44, %c0_45, %c0_46] : memref<2x1x32xf32, #tpu.memory_space<vmem>>, vector<1x1x32xf32>
    %116 = vector.shape_cast %115 : vector<1x1x32xf32> to vector<1x32xf32>
    %117 = vector.broadcast %116 : vector<1x32xf32> to vector<8x32xf32>
    %118 = arith.addf %114, %117 : vector<8x32xf32>
    %119 = arith.addf %118, %27 : vector<8x32xf32>
    %c0_47 = arith.constant 0 : index
    %c0_48 = arith.constant 0 : index
    %c0_49 = arith.constant 0 : index
    %120 = vector.load %arg9[%c0_47, %c0_48, %c0_49] : memref<2x1x32xf32, #tpu.memory_space<vmem>>, vector<1x1x32xf32>
    %121 = vector.shape_cast %120 : vector<1x1x32xf32> to vector<1x32xf32>
    %c0_50 = arith.constant 0 : index
    %c0_51 = arith.constant 0 : index
    %c0_52 = arith.constant 0 : index
    %122 = vector.load %arg10[%c0_50, %c0_51, %c0_52] : memref<2x1x32xf32, #tpu.memory_space<vmem>>, vector<1x1x32xf32>
    %123 = vector.shape_cast %122 : vector<1x1x32xf32> to vector<1x32xf32>
    %cst_53 = arith.constant dense<0.000000e+00> : vector<8xf32>
    %124 = vector.multi_reduction <add>, %119, %cst_53 [1] : vector<8x32xf32> to vector<8xf32>
    %125 = vector.shape_cast %124 : vector<8xf32> to vector<8x1xf32>
    %cst_54 = arith.constant 3.200000e+01 : f32
    %126 = vector.broadcast %cst_54 : f32 to vector<8x1xf32>
    %127 = arith.divf %125, %126 : vector<8x1xf32>
    %128 = vector.broadcast %127 : vector<8x1xf32> to vector<8x32xf32>
    %129 = arith.subf %119, %128 : vector<8x32xf32>
    %130 = arith.mulf %129, %129 : vector<8x32xf32>
    %cst_55 = arith.constant dense<0.000000e+00> : vector<8xf32>
    %131 = vector.multi_reduction <add>, %130, %cst_55 [1] : vector<8x32xf32> to vector<8xf32>
    %132 = vector.shape_cast %131 : vector<8xf32> to vector<8x1xf32>
    %cst_56 = arith.constant 3.200000e+01 : f32
    %133 = vector.broadcast %cst_56 : f32 to vector<8x1xf32>
    %134 = arith.divf %132, %133 : vector<8x1xf32>
    %135 = vector.broadcast %127 : vector<8x1xf32> to vector<8x32xf32>
    %136 = arith.subf %119, %135 : vector<8x32xf32>
    %cst_57 = arith.constant 9.99999996E-13 : f32
    %137 = vector.broadcast %cst_57 : f32 to vector<8x1xf32>
    %138 = arith.addf %134, %137 : vector<8x1xf32>
    %139 = math.rsqrt %138 : vector<8x1xf32>
    %140 = vector.broadcast %139 : vector<8x1xf32> to vector<8x32xf32>
    %141 = arith.mulf %136, %140 : vector<8x32xf32>
    %142 = vector.broadcast %121 : vector<1x32xf32> to vector<8x32xf32>
    %143 = arith.mulf %141, %142 : vector<8x32xf32>
    %144 = vector.broadcast %123 : vector<1x32xf32> to vector<8x32xf32>
    %145 = arith.addf %143, %144 : vector<8x32xf32>
    %c0_58 = arith.constant 0 : index
    %c0_59 = arith.constant 0 : index
    %c0_60 = arith.constant 0 : index
    %146 = vector.load %arg11[%c0_58, %c0_59, %c0_60] : memref<2x32x64xf32, #tpu.memory_space<vmem>>, vector<1x32x64xf32>
    %147 = vector.shape_cast %146 : vector<1x32x64xf32> to vector<32x64xf32>
    %cst_61 = arith.constant dense<0.000000e+00> : vector<8x64xf32>
    %148 = tpu.matmul %145, %147, %cst_61 {dimension_numbers = #tpu.dot_dimension_numbers<[1], [0], [0], [1], [0, 0, 1, 1], [], []>} : vector<8x32xf32>, vector<32x64xf32>, vector<8x64xf32> -> vector<8x64xf32>
    %c0_62 = arith.constant 0 : index
    %c0_63 = arith.constant 0 : index
    %c0_64 = arith.constant 0 : index
    %149 = vector.load %arg12[%c0_62, %c0_63, %c0_64] : memref<2x1x64xf32, #tpu.memory_space<vmem>>, vector<1x1x64xf32>
    %150 = vector.shape_cast %149 : vector<1x1x64xf32> to vector<1x64xf32>
    %151 = vector.broadcast %150 : vector<1x64xf32> to vector<8x64xf32>
    %152 = arith.addf %148, %151 : vector<8x64xf32>
    %cst_65 = arith.constant 5.000000e-01 : f32
    %153 = vector.broadcast %cst_65 : f32 to vector<8x64xf32>
    %154 = arith.mulf %153, %152 : vector<8x64xf32>
    %155 = arith.mulf %152, %152 : vector<8x64xf32>
    %156 = arith.mulf %155, %152 : vector<8x64xf32>
    %cst_66 = arith.constant 4.471500e-02 : f32
    %157 = vector.broadcast %cst_66 : f32 to vector<8x64xf32>
    %158 = arith.mulf %157, %156 : vector<8x64xf32>
    %159 = arith.addf %152, %158 : vector<8x64xf32>
    %cst_67 = arith.constant 0.797884583 : f32
    %160 = vector.broadcast %cst_67 : f32 to vector<8x64xf32>
    %161 = arith.mulf %160, %159 : vector<8x64xf32>
    %162 = math.tanh %161 : vector<8x64xf32>
    %cst_68 = arith.constant 1.000000e+00 : f32
    %163 = vector.broadcast %cst_68 : f32 to vector<8x64xf32>
    %164 = arith.addf %163, %162 : vector<8x64xf32>
    %165 = arith.mulf %154, %164 : vector<8x64xf32>
    %c0_69 = arith.constant 0 : index
    %c0_70 = arith.constant 0 : index
    %c0_71 = arith.constant 0 : index
    %166 = vector.load %arg13[%c0_69, %c0_70, %c0_71] : memref<2x64x32xf32, #tpu.memory_space<vmem>>, vector<1x64x32xf32>
    %167 = vector.shape_cast %166 : vector<1x64x32xf32> to vector<64x32xf32>
    %cst_72 = arith.constant dense<0.000000e+00> : vector<8x32xf32>
    %168 = tpu.matmul %165, %167, %cst_72 {dimension_numbers = #tpu.dot_dimension_numbers<[1], [0], [0], [1], [0, 0, 1, 1], [], []>} : vector<8x64xf32>, vector<64x32xf32>, vector<8x32xf32> -> vector<8x32xf32>
    %c0_73 = arith.constant 0 : index
    %c0_74 = arith.constant 0 : index
    %c0_75 = arith.constant 0 : index
    %169 = vector.load %arg14[%c0_73, %c0_74, %c0_75] : memref<2x1x32xf32, #tpu.memory_space<vmem>>, vector<1x1x32xf32>
    %170 = vector.shape_cast %169 : vector<1x1x32xf32> to vector<1x32xf32>
    %171 = vector.broadcast %170 : vector<1x32xf32> to vector<8x32xf32>
    %172 = arith.addf %168, %171 : vector<8x32xf32>
    %173 = arith.addf %172, %145 : vector<8x32xf32>
    %c0_76 = arith.constant 0 : index
    %c0_77 = arith.constant 0 : index
    %c0_78 = arith.constant 0 : index
    %174 = vector.load %arg15[%c0_76, %c0_77, %c0_78] : memref<2x1x32xf32, #tpu.memory_space<vmem>>, vector<1x1x32xf32>
    %175 = vector.shape_cast %174 : vector<1x1x32xf32> to vector<1x32xf32>
    %c0_79 = arith.constant 0 : index
    %c0_80 = arith.constant 0 : index
    %c0_81 = arith.constant 0 : index
    %176 = vector.load %arg16[%c0_79, %c0_80, %c0_81] : memref<2x1x32xf32, #tpu.memory_space<vmem>>, vector<1x1x32xf32>
    %177 = vector.shape_cast %176 : vector<1x1x32xf32> to vector<1x32xf32>
    %cst_82 = arith.constant dense<0.000000e+00> : vector<8xf32>
    %178 = vector.multi_reduction <add>, %173, %cst_82 [1] : vector<8x32xf32> to vector<8xf32>
    %179 = vector.shape_cast %178 : vector<8xf32> to vector<8x1xf32>
    %cst_83 = arith.constant 3.200000e+01 : f32
    %180 = vector.broadcast %cst_83 : f32 to vector<8x1xf32>
    %181 = arith.divf %179, %180 : vector<8x1xf32>
    %182 = vector.broadcast %181 : vector<8x1xf32> to vector<8x32xf32>
    %183 = arith.subf %173, %182 : vector<8x32xf32>
    %184 = arith.mulf %183, %183 : vector<8x32xf32>
    %cst_84 = arith.constant dense<0.000000e+00> : vector<8xf32>
    %185 = vector.multi_reduction <add>, %184, %cst_84 [1] : vector<8x32xf32> to vector<8xf32>
    %186 = vector.shape_cast %185 : vector<8xf32> to vector<8x1xf32>
    %cst_85 = arith.constant 3.200000e+01 : f32
    %187 = vector.broadcast %cst_85 : f32 to vector<8x1xf32>
    %188 = arith.divf %186, %187 : vector<8x1xf32>
    %189 = vector.broadcast %181 : vector<8x1xf32> to vector<8x32xf32>
    %190 = arith.subf %173, %189 : vector<8x32xf32>
    %cst_86 = arith.constant 9.99999996E-13 : f32
    %191 = vector.broadcast %cst_86 : f32 to vector<8x1xf32>
    %192 = arith.addf %188, %191 : vector<8x1xf32>
    %193 = math.rsqrt %192 : vector<8x1xf32>
    %194 = vector.broadcast %193 : vector<8x1xf32> to vector<8x32xf32>
    %195 = arith.mulf %190, %194 : vector<8x32xf32>
    %196 = vector.broadcast %175 : vector<1x32xf32> to vector<8x32xf32>
    %197 = arith.mulf %195, %196 : vector<8x32xf32>
    %198 = vector.broadcast %177 : vector<1x32xf32> to vector<8x32xf32>
    %199 = arith.addf %197, %198 : vector<8x32xf32>
    %c1 = arith.constant 1 : index
    %c0_87 = arith.constant 0 : index
    %c0_88 = arith.constant 0 : index
    %200 = vector.load %arg5[%c1, %c0_87, %c0_88] : memref<2x32x96xf32, #tpu.memory_space<vmem>>, vector<1x32x96xf32>
    %201 = vector.shape_cast %200 : vector<1x32x96xf32> to vector<32x96xf32>
    %cst_89 = arith.constant dense<0.000000e+00> : vector<8x96xf32>
    %202 = tpu.matmul %199, %201, %cst_89 {dimension_numbers = #tpu.dot_dimension_numbers<[1], [0], [0], [1], [0, 0, 1, 1], [], []>} : vector<8x32xf32>, vector<32x96xf32>, vector<8x96xf32> -> vector<8x96xf32>
    %c1_90 = arith.constant 1 : index
    %c0_91 = arith.constant 0 : index
    %c0_92 = arith.constant 0 : index
    %203 = vector.load %arg6[%c1_90, %c0_91, %c0_92] : memref<2x1x96xf32, #tpu.memory_space<vmem>>, vector<1x1x96xf32>
    %204 = vector.shape_cast %203 : vector<1x1x96xf32> to vector<1x96xf32>
    %205 = vector.broadcast %204 : vector<1x96xf32> to vector<8x96xf32>
    %206 = arith.addf %202, %205 : vector<8x96xf32>
    %207 = vector.extract_strided_slice %206 {offsets = [0, 0], sizes = [8, 8], strides = [1, 1]} : vector<8x96xf32> to vector<8x8xf32>
    %208 = vector.extract_strided_slice %206 {offsets = [0, 32], sizes = [8, 8], strides = [1, 1]} : vector<8x96xf32> to vector<8x8xf32>
    %209 = vector.extract_strided_slice %206 {offsets = [0, 64], sizes = [8, 8], strides = [1, 1]} : vector<8x96xf32> to vector<8x8xf32>
    %cst_93 = arith.constant dense<0.000000e+00> : vector<8x8xf32>
    %210 = tpu.matmul %207, %208, %cst_93 {dimension_numbers = #tpu.dot_dimension_numbers<[1], [1], [0], [0], [0, 0, 1, 0], [], []>} : vector<8x8xf32>, vector<8x8xf32>, vector<8x8xf32> -> vector<8x8xf32>
    %cst_94 = arith.constant 0.353553385 : f32
    %211 = vector.broadcast %cst_94 : f32 to vector<8x8xf32>
    %212 = arith.mulf %210, %211 : vector<8x8xf32>
    %213 = vector.broadcast %3 : vector<1x8xf32> to vector<8x8xf32>
    %214 = arith.addf %212, %213 : vector<8x8xf32>
    %cst_95 = arith.constant dense<0xFF800000> : vector<8xf32>
    %215 = vector.multi_reduction <maximumf>, %214, %cst_95 [1] : vector<8x8xf32> to vector<8xf32>
    %216 = vector.shape_cast %215 : vector<8xf32> to vector<8x1xf32>
    %217 = vector.broadcast %216 : vector<8x1xf32> to vector<8x8xf32>
    %218 = arith.subf %214, %217 : vector<8x8xf32>
    %219 = math.exp %218 : vector<8x8xf32>
    %cst_96 = arith.constant dense<0.000000e+00> : vector<8xf32>
    %220 = vector.multi_reduction <add>, %219, %cst_96 [1] : vector<8x8xf32> to vector<8xf32>
    %221 = vector.shape_cast %220 : vector<8xf32> to vector<8x1xf32>
    %222 = tpu.reciprocal %221 {approx = true} : vector<8x1xf32> -> vector<8x1xf32>
    %223 = vector.broadcast %222 : vector<8x1xf32> to vector<8x8xf32>
    %224 = arith.mulf %219, %223 : vector<8x8xf32>
    %cst_97 = arith.constant dense<0.000000e+00> : vector<8x8xf32>
    %225 = tpu.matmul %224, %209, %cst_97 {dimension_numbers = #tpu.dot_dimension_numbers<[1], [0], [0], [1], [0, 0, 1, 1], [], []>} : vector<8x8xf32>, vector<8x8xf32>, vector<8x8xf32> -> vector<8x8xf32>
    %226 = vector.extract_strided_slice %206 {offsets = [0, 8], sizes = [8, 8], strides = [1, 1]} : vector<8x96xf32> to vector<8x8xf32>
    %227 = vector.extract_strided_slice %206 {offsets = [0, 40], sizes = [8, 8], strides = [1, 1]} : vector<8x96xf32> to vector<8x8xf32>
    %228 = vector.extract_strided_slice %206 {offsets = [0, 72], sizes = [8, 8], strides = [1, 1]} : vector<8x96xf32> to vector<8x8xf32>
    %cst_98 = arith.constant dense<0.000000e+00> : vector<8x8xf32>
    %229 = tpu.matmul %226, %227, %cst_98 {dimension_numbers = #tpu.dot_dimension_numbers<[1], [1], [0], [0], [0, 0, 1, 0], [], []>} : vector<8x8xf32>, vector<8x8xf32>, vector<8x8xf32> -> vector<8x8xf32>
    %cst_99 = arith.constant 0.353553385 : f32
    %230 = vector.broadcast %cst_99 : f32 to vector<8x8xf32>
    %231 = arith.mulf %229, %230 : vector<8x8xf32>
    %232 = vector.broadcast %3 : vector<1x8xf32> to vector<8x8xf32>
    %233 = arith.addf %231, %232 : vector<8x8xf32>
    %cst_100 = arith.constant dense<0xFF800000> : vector<8xf32>
    %234 = vector.multi_reduction <maximumf>, %233, %cst_100 [1] : vector<8x8xf32> to vector<8xf32>
    %235 = vector.shape_cast %234 : vector<8xf32> to vector<8x1xf32>
    %236 = vector.broadcast %235 : vector<8x1xf32> to vector<8x8xf32>
    %237 = arith.subf %233, %236 : vector<8x8xf32>
    %238 = math.exp %237 : vector<8x8xf32>
    %cst_101 = arith.constant dense<0.000000e+00> : vector<8xf32>
    %239 = vector.multi_reduction <add>, %238, %cst_101 [1] : vector<8x8xf32> to vector<8xf32>
    %240 = vector.shape_cast %239 : vector<8xf32> to vector<8x1xf32>
    %241 = tpu.reciprocal %240 {approx = true} : vector<8x1xf32> -> vector<8x1xf32>
    %242 = vector.broadcast %241 : vector<8x1xf32> to vector<8x8xf32>
    %243 = arith.mulf %238, %242 : vector<8x8xf32>
    %cst_102 = arith.constant dense<0.000000e+00> : vector<8x8xf32>
    %244 = tpu.matmul %243, %228, %cst_102 {dimension_numbers = #tpu.dot_dimension_numbers<[1], [0], [0], [1], [0, 0, 1, 1], [], []>} : vector<8x8xf32>, vector<8x8xf32>, vector<8x8xf32> -> vector<8x8xf32>
    %245 = vector.extract_strided_slice %206 {offsets = [0, 16], sizes = [8, 8], strides = [1, 1]} : vector<8x96xf32> to vector<8x8xf32>
    %246 = vector.extract_strided_slice %206 {offsets = [0, 48], sizes = [8, 8], strides = [1, 1]} : vector<8x96xf32> to vector<8x8xf32>
    %247 = vector.extract_strided_slice %206 {offsets = [0, 80], sizes = [8, 8], strides = [1, 1]} : vector<8x96xf32> to vector<8x8xf32>
    %cst_103 = arith.constant dense<0.000000e+00> : vector<8x8xf32>
    %248 = tpu.matmul %245, %246, %cst_103 {dimension_numbers = #tpu.dot_dimension_numbers<[1], [1], [0], [0], [0, 0, 1, 0], [], []>} : vector<8x8xf32>, vector<8x8xf32>, vector<8x8xf32> -> vector<8x8xf32>
    %cst_104 = arith.constant 0.353553385 : f32
    %249 = vector.broadcast %cst_104 : f32 to vector<8x8xf32>
    %250 = arith.mulf %248, %249 : vector<8x8xf32>
    %251 = vector.broadcast %3 : vector<1x8xf32> to vector<8x8xf32>
    %252 = arith.addf %250, %251 : vector<8x8xf32>
    %cst_105 = arith.constant dense<0xFF800000> : vector<8xf32>
    %253 = vector.multi_reduction <maximumf>, %252, %cst_105 [1] : vector<8x8xf32> to vector<8xf32>
    %254 = vector.shape_cast %253 : vector<8xf32> to vector<8x1xf32>
    %255 = vector.broadcast %254 : vector<8x1xf32> to vector<8x8xf32>
    %256 = arith.subf %252, %255 : vector<8x8xf32>
    %257 = math.exp %256 : vector<8x8xf32>
    %cst_106 = arith.constant dense<0.000000e+00> : vector<8xf32>
    %258 = vector.multi_reduction <add>, %257, %cst_106 [1] : vector<8x8xf32> to vector<8xf32>
    %259 = vector.shape_cast %258 : vector<8xf32> to vector<8x1xf32>
    %260 = tpu.reciprocal %259 {approx = true} : vector<8x1xf32> -> vector<8x1xf32>
    %261 = vector.broadcast %260 : vector<8x1xf32> to vector<8x8xf32>
    %262 = arith.mulf %257, %261 : vector<8x8xf32>
    %cst_107 = arith.constant dense<0.000000e+00> : vector<8x8xf32>
    %263 = tpu.matmul %262, %247, %cst_107 {dimension_numbers = #tpu.dot_dimension_numbers<[1], [0], [0], [1], [0, 0, 1, 1], [], []>} : vector<8x8xf32>, vector<8x8xf32>, vector<8x8xf32> -> vector<8x8xf32>
    %264 = vector.extract_strided_slice %206 {offsets = [0, 24], sizes = [8, 8], strides = [1, 1]} : vector<8x96xf32> to vector<8x8xf32>
    %265 = vector.extract_strided_slice %206 {offsets = [0, 56], sizes = [8, 8], strides = [1, 1]} : vector<8x96xf32> to vector<8x8xf32>
    %266 = vector.extract_strided_slice %206 {offsets = [0, 88], sizes = [8, 8], strides = [1, 1]} : vector<8x96xf32> to vector<8x8xf32>
    %cst_108 = arith.constant dense<0.000000e+00> : vector<8x8xf32>
    %267 = tpu.matmul %264, %265, %cst_108 {dimension_numbers = #tpu.dot_dimension_numbers<[1], [1], [0], [0], [0, 0, 1, 0], [], []>} : vector<8x8xf32>, vector<8x8xf32>, vector<8x8xf32> -> vector<8x8xf32>
    %cst_109 = arith.constant 0.353553385 : f32
    %268 = vector.broadcast %cst_109 : f32 to vector<8x8xf32>
    %269 = arith.mulf %267, %268 : vector<8x8xf32>
    %270 = vector.broadcast %3 : vector<1x8xf32> to vector<8x8xf32>
    %271 = arith.addf %269, %270 : vector<8x8xf32>
    %cst_110 = arith.constant dense<0xFF800000> : vector<8xf32>
    %272 = vector.multi_reduction <maximumf>, %271, %cst_110 [1] : vector<8x8xf32> to vector<8xf32>
    %273 = vector.shape_cast %272 : vector<8xf32> to vector<8x1xf32>
    %274 = vector.broadcast %273 : vector<8x1xf32> to vector<8x8xf32>
    %275 = arith.subf %271, %274 : vector<8x8xf32>
    %276 = math.exp %275 : vector<8x8xf32>
    %cst_111 = arith.constant dense<0.000000e+00> : vector<8xf32>
    %277 = vector.multi_reduction <add>, %276, %cst_111 [1] : vector<8x8xf32> to vector<8xf32>
    %278 = vector.shape_cast %277 : vector<8xf32> to vector<8x1xf32>
    %279 = tpu.reciprocal %278 {approx = true} : vector<8x1xf32> -> vector<8x1xf32>
    %280 = vector.broadcast %279 : vector<8x1xf32> to vector<8x8xf32>
    %281 = arith.mulf %276, %280 : vector<8x8xf32>
    %cst_112 = arith.constant dense<0.000000e+00> : vector<8x8xf32>
    %282 = tpu.matmul %281, %266, %cst_112 {dimension_numbers = #tpu.dot_dimension_numbers<[1], [0], [0], [1], [0, 0, 1, 1], [], []>} : vector<8x8xf32>, vector<8x8xf32>, vector<8x8xf32> -> vector<8x8xf32>
    %283 = tpu.concatenate %225, %244, %263, %282 in 1 : vector<8x8xf32>, vector<8x8xf32>, vector<8x8xf32>, vector<8x8xf32> -> vector<8x32xf32>
    %c1_113 = arith.constant 1 : index
    %c0_114 = arith.constant 0 : index
    %c0_115 = arith.constant 0 : index
    %284 = vector.load %arg7[%c1_113, %c0_114, %c0_115] : memref<2x32x32xf32, #tpu.memory_space<vmem>>, vector<1x32x32xf32>
    %285 = vector.shape_cast %284 : vector<1x32x32xf32> to vector<32x32xf32>
    %cst_116 = arith.constant dense<0.000000e+00> : vector<8x32xf32>
    %286 = tpu.matmul %283, %285, %cst_116 {dimension_numbers = #tpu.dot_dimension_numbers<[1], [0], [0], [1], [0, 0, 1, 1], [], []>} : vector<8x32xf32>, vector<32x32xf32>, vector<8x32xf32> -> vector<8x32xf32>
    %c1_117 = arith.constant 1 : index
    %c0_118 = arith.constant 0 : index
    %c0_119 = arith.constant 0 : index
    %287 = vector.load %arg8[%c1_117, %c0_118, %c0_119] : memref<2x1x32xf32, #tpu.memory_space<vmem>>, vector<1x1x32xf32>
    %288 = vector.shape_cast %287 : vector<1x1x32xf32> to vector<1x32xf32>
    %289 = vector.broadcast %288 : vector<1x32xf32> to vector<8x32xf32>
    %290 = arith.addf %286, %289 : vector<8x32xf32>
    %291 = arith.addf %290, %199 : vector<8x32xf32>
    %c1_120 = arith.constant 1 : index
    %c0_121 = arith.constant 0 : index
    %c0_122 = arith.constant 0 : index
    %292 = vector.load %arg9[%c1_120, %c0_121, %c0_122] : memref<2x1x32xf32, #tpu.memory_space<vmem>>, vector<1x1x32xf32>
    %293 = vector.shape_cast %292 : vector<1x1x32xf32> to vector<1x32xf32>
    %c1_123 = arith.constant 1 : index
    %c0_124 = arith.constant 0 : index
    %c0_125 = arith.constant 0 : index
    %294 = vector.load %arg10[%c1_123, %c0_124, %c0_125] : memref<2x1x32xf32, #tpu.memory_space<vmem>>, vector<1x1x32xf32>
    %295 = vector.shape_cast %294 : vector<1x1x32xf32> to vector<1x32xf32>
    %cst_126 = arith.constant dense<0.000000e+00> : vector<8xf32>
    %296 = vector.multi_reduction <add>, %291, %cst_126 [1] : vector<8x32xf32> to vector<8xf32>
    %297 = vector.shape_cast %296 : vector<8xf32> to vector<8x1xf32>
    %cst_127 = arith.constant 3.200000e+01 : f32
    %298 = vector.broadcast %cst_127 : f32 to vector<8x1xf32>
    %299 = arith.divf %297, %298 : vector<8x1xf32>
    %300 = vector.broadcast %299 : vector<8x1xf32> to vector<8x32xf32>
    %301 = arith.subf %291, %300 : vector<8x32xf32>
    %302 = arith.mulf %301, %301 : vector<8x32xf32>
    %cst_128 = arith.constant dense<0.000000e+00> : vector<8xf32>
    %303 = vector.multi_reduction <add>, %302, %cst_128 [1] : vector<8x32xf32> to vector<8xf32>
    %304 = vector.shape_cast %303 : vector<8xf32> to vector<8x1xf32>
    %cst_129 = arith.constant 3.200000e+01 : f32
    %305 = vector.broadcast %cst_129 : f32 to vector<8x1xf32>
    %306 = arith.divf %304, %305 : vector<8x1xf32>
    %307 = vector.broadcast %299 : vector<8x1xf32> to vector<8x32xf32>
    %308 = arith.subf %291, %307 : vector<8x32xf32>
    %cst_130 = arith.constant 9.99999996E-13 : f32
    %309 = vector.broadcast %cst_130 : f32 to vector<8x1xf32>
    %310 = arith.addf %306, %309 : vector<8x1xf32>
    %311 = math.rsqrt %310 : vector<8x1xf32>
    %312 = vector.broadcast %311 : vector<8x1xf32> to vector<8x32xf32>
    %313 = arith.mulf %308, %312 : vector<8x32xf32>
    %314 = vector.broadcast %293 : vector<1x32xf32> to vector<8x32xf32>
    %315 = arith.mulf %313, %314 : vector<8x32xf32>
    %316 = vector.broadcast %295 : vector<1x32xf32> to vector<8x32xf32>
    %317 = arith.addf %315, %316 : vector<8x32xf32>
    %c1_131 = arith.constant 1 : index
    %c0_132 = arith.constant 0 : index
    %c0_133 = arith.constant 0 : index
    %318 = vector.load %arg11[%c1_131, %c0_132, %c0_133] : memref<2x32x64xf32, #tpu.memory_space<vmem>>, vector<1x32x64xf32>
    %319 = vector.shape_cast %318 : vector<1x32x64xf32> to vector<32x64xf32>
    %cst_134 = arith.constant dense<0.000000e+00> : vector<8x64xf32>
    %320 = tpu.matmul %317, %319, %cst_134 {dimension_numbers = #tpu.dot_dimension_numbers<[1], [0], [0], [1], [0, 0, 1, 1], [], []>} : vector<8x32xf32>, vector<32x64xf32>, vector<8x64xf32> -> vector<8x64xf32>
    %c1_135 = arith.constant 1 : index
    %c0_136 = arith.constant 0 : index
    %c0_137 = arith.constant 0 : index
    %321 = vector.load %arg12[%c1_135, %c0_136, %c0_137] : memref<2x1x64xf32, #tpu.memory_space<vmem>>, vector<1x1x64xf32>
    %322 = vector.shape_cast %321 : vector<1x1x64xf32> to vector<1x64xf32>
    %323 = vector.broadcast %322 : vector<1x64xf32> to vector<8x64xf32>
    %324 = arith.addf %320, %323 : vector<8x64xf32>
    %cst_138 = arith.constant 5.000000e-01 : f32
    %325 = vector.broadcast %cst_138 : f32 to vector<8x64xf32>
    %326 = arith.mulf %325, %324 : vector<8x64xf32>
    %327 = arith.mulf %324, %324 : vector<8x64xf32>
    %328 = arith.mulf %327, %324 : vector<8x64xf32>
    %cst_139 = arith.constant 4.471500e-02 : f32
    %329 = vector.broadcast %cst_139 : f32 to vector<8x64xf32>
    %330 = arith.mulf %329, %328 : vector<8x64xf32>
    %331 = arith.addf %324, %330 : vector<8x64xf32>
    %cst_140 = arith.constant 0.797884583 : f32
    %332 = vector.broadcast %cst_140 : f32 to vector<8x64xf32>
    %333 = arith.mulf %332, %331 : vector<8x64xf32>
    %334 = math.tanh %333 : vector<8x64xf32>
    %cst_141 = arith.constant 1.000000e+00 : f32
    %335 = vector.broadcast %cst_141 : f32 to vector<8x64xf32>
    %336 = arith.addf %335, %334 : vector<8x64xf32>
    %337 = arith.mulf %326, %336 : vector<8x64xf32>
    %c1_142 = arith.constant 1 : index
    %c0_143 = arith.constant 0 : index
    %c0_144 = arith.constant 0 : index
    %338 = vector.load %arg13[%c1_142, %c0_143, %c0_144] : memref<2x64x32xf32, #tpu.memory_space<vmem>>, vector<1x64x32xf32>
    %339 = vector.shape_cast %338 : vector<1x64x32xf32> to vector<64x32xf32>
    %cst_145 = arith.constant dense<0.000000e+00> : vector<8x32xf32>
    %340 = tpu.matmul %337, %339, %cst_145 {dimension_numbers = #tpu.dot_dimension_numbers<[1], [0], [0], [1], [0, 0, 1, 1], [], []>} : vector<8x64xf32>, vector<64x32xf32>, vector<8x32xf32> -> vector<8x32xf32>
    %c1_146 = arith.constant 1 : index
    %c0_147 = arith.constant 0 : index
    %c0_148 = arith.constant 0 : index
    %341 = vector.load %arg14[%c1_146, %c0_147, %c0_148] : memref<2x1x32xf32, #tpu.memory_space<vmem>>, vector<1x1x32xf32>
    %342 = vector.shape_cast %341 : vector<1x1x32xf32> to vector<1x32xf32>
    %343 = vector.broadcast %342 : vector<1x32xf32> to vector<8x32xf32>
    %344 = arith.addf %340, %343 : vector<8x32xf32>
    %345 = arith.addf %344, %317 : vector<8x32xf32>
    %c1_149 = arith.constant 1 : index
    %c0_150 = arith.constant 0 : index
    %c0_151 = arith.constant 0 : index
    %346 = vector.load %arg15[%c1_149, %c0_150, %c0_151] : memref<2x1x32xf32, #tpu.memory_space<vmem>>, vector<1x1x32xf32>
    %347 = vector.shape_cast %346 : vector<1x1x32xf32> to vector<1x32xf32>
    %c1_152 = arith.constant 1 : index
    %c0_153 = arith.constant 0 : index
    %c0_154 = arith.constant 0 : index
    %348 = vector.load %arg16[%c1_152, %c0_153, %c0_154] : memref<2x1x32xf32, #tpu.memory_space<vmem>>, vector<1x1x32xf32>
    %349 = vector.shape_cast %348 : vector<1x1x32xf32> to vector<1x32xf32>
    %cst_155 = arith.constant dense<0.000000e+00> : vector<8xf32>
    %350 = vector.multi_reduction <add>, %345, %cst_155 [1] : vector<8x32xf32> to vector<8xf32>
    %351 = vector.shape_cast %350 : vector<8xf32> to vector<8x1xf32>
    %cst_156 = arith.constant 3.200000e+01 : f32
    %352 = vector.broadcast %cst_156 : f32 to vector<8x1xf32>
    %353 = arith.divf %351, %352 : vector<8x1xf32>
    %354 = vector.broadcast %353 : vector<8x1xf32> to vector<8x32xf32>
    %355 = arith.subf %345, %354 : vector<8x32xf32>
    %356 = arith.mulf %355, %355 : vector<8x32xf32>
    %cst_157 = arith.constant dense<0.000000e+00> : vector<8xf32>
    %357 = vector.multi_reduction <add>, %356, %cst_157 [1] : vector<8x32xf32> to vector<8xf32>
    %358 = vector.shape_cast %357 : vector<8xf32> to vector<8x1xf32>
    %cst_158 = arith.constant 3.200000e+01 : f32
    %359 = vector.broadcast %cst_158 : f32 to vector<8x1xf32>
    %360 = arith.divf %358, %359 : vector<8x1xf32>
    %361 = vector.broadcast %353 : vector<8x1xf32> to vector<8x32xf32>
    %362 = arith.subf %345, %361 : vector<8x32xf32>
    %cst_159 = arith.constant 9.99999996E-13 : f32
    %363 = vector.broadcast %cst_159 : f32 to vector<8x1xf32>
    %364 = arith.addf %360, %363 : vector<8x1xf32>
    %365 = math.rsqrt %364 : vector<8x1xf32>
    %366 = vector.broadcast %365 : vector<8x1xf32> to vector<8x32xf32>
    %367 = arith.mulf %362, %366 : vector<8x32xf32>
    %368 = vector.broadcast %347 : vector<1x32xf32> to vector<8x32xf32>
    %369 = arith.mulf %367, %368 : vector<8x32xf32>
    %370 = vector.broadcast %349 : vector<1x32xf32> to vector<8x32xf32>
    %371 = arith.addf %369, %370 : vector<8x32xf32>
    %372 = vector.extract_strided_slice %371 {offsets = [0, 0], sizes = [1, 32], strides = [1, 1]} : vector<8x32xf32> to vector<1x32xf32>
    %c0_160 = arith.constant 0 : index
    %c0_161 = arith.constant 0 : index
    %373 = vector.load %arg17[%c0_160, %c0_161] : memref<32x32xf32, #tpu.memory_space<vmem>>, vector<32x32xf32>
    %cst_162 = arith.constant dense<0.000000e+00> : vector<1x32xf32>
    %374 = tpu.matmul %372, %373, %cst_162 {dimension_numbers = #tpu.dot_dimension_numbers<[1], [0], [0], [1], [0, 0, 1, 1], [], []>} : vector<1x32xf32>, vector<32x32xf32>, vector<1x32xf32> -> vector<1x32xf32>
    %c0_163 = arith.constant 0 : index
    %c0_164 = arith.constant 0 : index
    %375 = vector.load %arg18[%c0_163, %c0_164] : memref<1x32xf32, #tpu.memory_space<vmem>>, vector<1x32xf32>
    %376 = arith.addf %374, %375 : vector<1x32xf32>
    %377 = math.tanh %376 : vector<1x32xf32>
    %c0_165 = arith.constant 0 : index
    %c0_166 = arith.constant 0 : index
    %378 = vector.load %arg19[%c0_165, %c0_166] : memref<32x16xf32, #tpu.memory_space<vmem>>, vector<32x16xf32>
    %c0_167 = arith.constant 0 : index
    %c0_168 = arith.constant 0 : index
    %379 = vector.load %arg20[%c0_167, %c0_168] : memref<1x16xf32, #tpu.memory_space<vmem>>, vector<1x16xf32>
    %cst_169 = arith.constant dense<0.000000e+00> : vector<8x16xf32>
    %380 = tpu.matmul %371, %378, %cst_169 {dimension_numbers = #tpu.dot_dimension_numbers<[1], [0], [0], [1], [0, 0, 1, 1], [], []>} : vector<8x32xf32>, vector<32x16xf32>, vector<8x16xf32> -> vector<8x16xf32>
    %381 = vector.broadcast %379 : vector<1x16xf32> to vector<8x16xf32>
    %382 = arith.addf %380, %381 : vector<8x16xf32>
    %c0_170 = arith.constant 0 : index
    %c0_171 = arith.constant 0 : index
    %c0_172 = arith.constant 0 : index
    %383 = vector.load %arg21[%c0_170, %c0_171, %c0_172] : memref<1x8x16xf32, #tpu.memory_space<vmem>>, vector<1x8x16xf32>
    %384 = vector.shape_cast %383 : vector<1x8x16xf32> to vector<8x16xf32>
    %385 = vector.shape_cast %382 : vector<8x16xf32> to vector<1x8x16xf32>
    tpu.vector_store %arg21[%c0_170, %c0_171, %c0_172], %385 {strides = array<i32>} : memref<1x8x16xf32, #tpu.memory_space<vmem>>, vector<1x8x16xf32>,
    %cst_173 = arith.constant dense<0.000000e+00> : vector<1x16xf32>
    %386 = tpu.matmul %377, %378, %cst_173 {dimension_numbers = #tpu.dot_dimension_numbers<[1], [0], [0], [1], [0, 0, 1, 1], [], []>} : vector<1x32xf32>, vector<32x16xf32>, vector<1x16xf32> -> vector<1x16xf32>
    %387 = arith.addf %386, %379 : vector<1x16xf32>
    %c0_174 = arith.constant 0 : index
    %c0_175 = arith.constant 0 : index
    %c0_176 = arith.constant 0 : index
    %388 = vector.load %arg22[%c0_174, %c0_175, %c0_176] : memref<1x1x16xf32, #tpu.memory_space<vmem>>, vector<1x1x16xf32>
    %389 = vector.shape_cast %388 : vector<1x1x16xf32> to vector<1x16xf32>
    %390 = vector.shape_cast %387 : vector<1x16xf32> to vector<1x1x16xf32>
    tpu.vector_store %arg22[%c0_174, %c0_175, %c0_176], %390 {strides = array<i32>} : memref<1x1x16xf32, #tpu.memory_space<vmem>>, vector<1x1x16xf32>,
    return
  }
  func.func @transform_0(%arg0: i32) -> (i32, i32, i32) {
    %c0_i32 = arith.constant 0 : i32
    %c0_i32_0 = arith.constant 0 : i32
    %c0_i32_1 = arith.constant 0 : i32
    return %arg0, %c0_i32, %c0_i32_0 : i32, i32, i32
  }
  func.func @transform_1(%arg0: i32) -> (i32, i32, i32) {
    %c0_i32 = arith.constant 0 : i32
    %c0_i32_0 = arith.constant 0 : i32
    %c0_i32_1 = arith.constant 0 : i32
    return %arg0, %c0_i32, %c0_i32_0 : i32, i32, i32
  }
  func.func @transform_2(%arg0: i32) -> (i32, i32) {
    %c0_i32 = arith.constant 0 : i32
    %c0_i32_0 = arith.constant 0 : i32
    %c0_i32_1 = arith.constant 0 : i32
    return %c0_i32, %c0_i32_0 : i32, i32
  }
  func.func @transform_3(%arg0: i32) -> (i32, i32) {
    %c0_i32 = arith.constant 0 : i32
    %c0_i32_0 = arith.constant 0 : i32
    %c0_i32_1 = arith.constant 0 : i32
    return %c0_i32, %c0_i32_0 : i32, i32
  }
  func.func @transform_4(%arg0: i32) -> (i32, i32, i32) {
    %c0_i32 = arith.constant 0 : i32
    %c0_i32_0 = arith.constant 0 : i32
    %c0_i32_1 = arith.constant 0 : i32
    %c0_i32_2 = arith.constant 0 : i32
    return %c0_i32, %c0_i32_0, %c0_i32_1 : i32, i32, i32
  }
  func.func @transform_5(%arg0: i32) -> (i32, i32, i32) {
    %c0_i32 = arith.constant 0 : i32
    %c0_i32_0 = arith.constant 0 : i32
    %c0_i32_1 = arith.constant 0 : i32
    %c0_i32_2 = arith.constant 0 : i32
    return %c0_i32, %c0_i32_0, %c0_i32_1 : i32, i32, i32
  }
  func.func @transform_6(%arg0: i32) -> (i32, i32, i32) {
    %c0_i32 = arith.constant 0 : i32
    %c0_i32_0 = arith.constant 0 : i32
    %c0_i32_1 = arith.constant 0 : i32
    %c0_i32_2 = arith.constant 0 : i32
    return %c0_i32, %c0_i32_0, %c0_i32_1 : i32, i32, i32
  }
  func.func @transform_7(%arg0: i32) -> (i32, i32, i32) {
    %c0_i32 = arith.constant 0 : i32
    %c0_i32_0 = arith.constant 0 : i32
    %c0_i32_1 = arith.constant 0 : i32
    %c0_i32_2 = arith.constant 0 : i32
    return %c0_i32, %c0_i32_0, %c0_i32_1 : i32, i32, i32
  }
  func.func @transform_8(%arg0: i32) -> (i32, i32, i32) {
    %c0_i32 = arith.constant 0 : i32
    %c0_i32_0 = arith.constant 0 : i32
    %c0_i32_1 = arith.constant 0 : i32
    %c0_i32_2 = arith.constant 0 : i32
    return %c0_i32, %c0_i32_0, %c0_i32_1 : i32, i32, i32
  }
  func.func @transform_9(%arg0: i32) -> (i32, i32, i32) {
    %c0_i32 = arith.constant 0 : i32
    %c0_i32_0 = arith.constant 0 : i32
    %c0_i32_1 = arith.constant 0 : i32
    %c0_i32_2 = arith.constant 0 : i32
    return %c0_i32, %c0_i32_0, %c0_i32_1 : i32, i32, i32
  }
  func.func @transform_10(%arg0: i32) -> (i32, i32, i32) {
    %c0_i32 = arith.constant 0 : i32
    %c0_i32_0 = arith.constant 0 : i32
    %c0_i32_1 = arith.constant 0 : i32
    %c0_i32_2 = arith.constant 0 : i32
    return %c0_i32, %c0_i32_0, %c0_i32_1 : i32, i32, i32
  }
  func.func @transform_11(%arg0: i32) -> (i32, i32, i32) {
    %c0_i32 = arith.constant 0 : i32
    %c0_i32_0 = arith.constant 0 : i32
    %c0_i32_1 = arith.constant 0 : i32
    %c0_i32_2 = arith.constant 0 : i32
    return %c0_i32, %c0_i32_0, %c0_i32_1 : i32, i32, i32
  }
  func.func @transform_12(%arg0: i32) -> (i32, i32, i32) {
    %c0_i32 = arith.constant 0 : i32
    %c0_i32_0 = arith.constant 0 : i32
    %c0_i32_1 = arith.constant 0 : i32
    %c0_i32_2 = arith.constant 0 : i32
    return %c0_i32, %c0_i32_0, %c0_i32_1 : i32, i32, i32
  }
  func.func @transform_13(%arg0: i32) -> (i32, i32, i32) {
    %c0_i32 = arith.constant 0 : i32
    %c0_i32_0 = arith.constant 0 : i32
    %c0_i32_1 = arith.constant 0 : i32
    %c0_i32_2 = arith.constant 0 : i32
    return %c0_i32, %c0_i32_0, %c0_i32_1 : i32, i32, i32
  }
  func.func @transform_14(%arg0: i32) -> (i32, i32, i32) {
    %c0_i32 = arith.constant 0 : i32
    %c0_i32_0 = arith.constant 0 : i32
    %c0_i32_1 = arith.constant 0 : i32
    %c0_i32_2 = arith.constant 0 : i32
    return %c0_i32, %c0_i32_0, %c0_i32_1 : i32, i32, i32
  }
  func.func @transform_15(%arg0: i32) -> (i32, i32, i32) {
    %c0_i32 = arith.constant 0 : i32
    %c0_i32_0 = arith.constant 0 : i32
    %c0_i32_1 = arith.constant 0 : i32
    %c0_i32_2 = arith.constant 0 : i32
    return %c0_i32, %c0_i32_0, %c0_i32_1 : i32, i32, i32
  }
  func.func @transform_16(%arg0: i32) -> (i32, i32) {
    %c0_i32 = arith.constant 0 : i32
    %c0_i32_0 = arith.constant 0 : i32
    %c0_i32_1 = arith.constant 0 : i32
    return %c0_i32, %c0_i32_0 : i32, i32
  }
  func.func @transform_17(%arg0: i32) -> (i32, i32) {
    %c0_i32 = arith.constant 0 : i32
    %c0_i32_0 = arith.constant 0 : i32
    %c0_i32_1 = arith.constant 0 : i32
    return %c0_i32, %c0_i32_0 : i32, i32
  }
  func.func @transform_18(%arg0: i32) -> (i32, i32) {
    %c0_i32 = arith.constant 0 : i32
    %c0_i32_0 = arith.constant 0 : i32
    %c0_i32_1 = arith.constant 0 : i32
    return %c0_i32, %c0_i32_0 : i32, i32
  }
  func.func @transform_19(%arg0: i32) -> (i32, i32) {
    %c0_i32 = arith.constant 0 : i32
    %c0_i32_0 = arith.constant 0 : i32
    %c0_i32_1 = arith.constant 0 : i32
    return %c0_i32, %c0_i32_0 : i32, i32
  }
  func.func @transform_20(%arg0: i32) -> (i32, i32, i32) {
    %c0_i32 = arith.constant 0 : i32
    %c0_i32_0 = arith.constant 0 : i32
    %c0_i32_1 = arith.constant 0 : i32
    return %arg0, %c0_i32, %c0_i32_0 : i32, i32, i32
  }
  func.func @transform_21(%arg0: i32) -> (i32, i32, i32) {
    %c0_i32 = arith.constant 0 : i32
    %c0_i32_0 = arith.constant 0 : i32
    %c0_i32_1 = arith.constant 0 : i32
    return %arg0, %c0_i32, %c0_i32_0 : i32, i32, i32
  }
}

</mosaic_0001>

<llo_original>
// kernel: bert_encoder_forward.1
$region0: #{bert_encoder_forward.1}
  #allocation0 [shape = 'u32[]', space=smem, size = 0x4, offset = 0x4, fixed_abs, tag = 'smem constant byte address 0x4 - core index']
  #allocation1 [shape = 'u32[72,128]{1,0:T(1,128)}', space=vmem, size = 0x9000, scoped, tag = 'internal scratch']
  %s0 = inlined_call_operand.vmem [shape: f32[2,8,32], index: 0, kind: input, shape index: {}]
  %s1 = inlined_call_operand.vmem [shape: f32[2,1,8], index: 1, kind: input, shape index: {}]
  %s2 = inlined_call_operand.vmem [shape: f32[1,32], index: 2, kind: input, shape index: {}]
  %s3 = inlined_call_operand.vmem [shape: f32[1,32], index: 3, kind: input, shape index: {}]
  %s4 = inlined_call_operand.vmem [shape: f32[2,32,96], index: 4, kind: input, shape index: {}]
  %s5 = inlined_call_operand.vmem [shape: f32[2,1,96], index: 5, kind: input, shape index: {}]
  %s6 = inlined_call_operand.vmem [shape: f32[2,32,32], index: 6, kind: input, shape index: {}]
  %s7 = inlined_call_operand.vmem [shape: f32[2,1,32], index: 7, kind: input, shape index: {}]
  %s8 = inlined_call_operand.vmem [shape: f32[2,1,32], index: 8, kind: input, shape index: {}]
  %s9 = inlined_call_operand.vmem [shape: f32[2,1,32], index: 9, kind: input, shape index: {}]
  %s10 = inlined_call_operand.vmem [shape: f32[2,32,64], index: 10, kind: input, shape index: {}]
  %s11 = inlined_call_operand.vmem [shape: f32[2,1,64], index: 11, kind: input, shape index: {}]
  %s12 = inlined_call_operand.vmem [shape: f32[2,64,32], index: 12, kind: input, shape index: {}]
  %s13 = inlined_call_operand.vmem [shape: f32[2,1,32], index: 13, kind: input, shape index: {}]
  %s14 = inlined_call_operand.vmem [shape: f32[2,1,32], index: 14, kind: input, shape index: {}]
  %s15 = inlined_call_operand.vmem [shape: f32[2,1,32], index: 15, kind: input, shape index: {}]
  %s16 = inlined_call_operand.vmem [shape: f32[32,32], index: 16, kind: input, shape index: {}]
  %s17 = inlined_call_operand.vmem [shape: f32[1,32], index: 17, kind: input, shape index: {}]
  %s18 = inlined_call_operand.vmem [shape: f32[32,16], index: 18, kind: input, shape index: {}]
  %s19 = inlined_call_operand.vmem [shape: f32[1,16], index: 19, kind: input, shape index: {}]
  %s20 = inlined_call_operand.hbm [shape: f32[2,8,16], index: 20, kind: output, shape index: {0}]
  %s21 = inlined_call_operand.hbm [shape: f32[2,1,16], index: 21, kind: output, shape index: {1}]
  %22 = xla_tuple %s20, %s21
  %s23 = sld [smem:[#allocation0]]
  $region121: #{bert_encoder_forward.1} parent=0
    _
  %s25 = ssub.s32 1, %s23
  %s26 = scalar_select 0, %s25, %s23
  $region1: #{bert_encoder_forward.1} parent=0
    #allocation2 [shape = 'u8[8192]{0}', space=vmem, size = 0x2000, scoped, tag = 'output window, operand 0']
    #allocation3 [shape = 's32[2]{0}', space=sflag, size = 0x8, scoped, tag = 'scoped memory for bert_encoder_forward.1']
    #allocation4 [shape = 'u8[1024]{0}', space=vmem, size = 0x400, scoped, tag = 'output window, operand 1']
    #allocation5 [shape = 's32[2]{0}', space=sflag, size = 0x8, scoped, tag = 'scoped memory for bert_encoder_forward.1']
    %27 = vsyncpa [#allocation3], 0
    %s28 = scalar_lea.sflag [#allocation3], 1
    %29 = vsyncpa %s28, 0
    %30 = vsyncpa [#allocation5], 0
    %s31 = scalar_lea.sflag [#allocation5], 1
    %32 = vsyncpa %s31, 0
    loop: start=0, step=1, limit=4
    $region2: #{bert_encoder_forward.1} parent=1 // loop_pre_header
      _
    $region3: #{bert_encoder_forward.1} parent=1 // loop_header
      %s34 = sphi 0, %s38
      %p35 = scmp.ge.s32.totalorder %s34, 4
      %s44 = sphi 0, %s46
      %s47 = sphi 0, %s44
      %s48 = sphi 0, %s47
      %s64 = sphi 0, %s48
      %s70 = sphi 0, %s72
      %s73 = sphi 0, %s70
      %s74 = sphi 0, %s73
      %s90 = sphi 0, %s74
      %s94 = sphi 0, %s94
      %s96 = sphi 0, %s94
      %s97 = sphi 0, %s96
      %s111 = sphi 0, %s97
      %s115 = sphi 0, %s115
      %s117 = sphi 0, %s115
      %s118 = sphi 0, %s117
      %s132 = sphi 0, %s118
      %s136 = sphi 0, %s136
      %s138 = sphi 0, %s136
      %s139 = sphi 0, %s138
      %s153 = sphi 0, %s139
      %s157 = sphi 0, %s157
      %s159 = sphi 0, %s157
      %s160 = sphi 0, %s159
      %s174 = sphi 0, %s160
      %s178 = sphi 0, %s178
      %s180 = sphi 0, %s178
      %s181 = sphi 0, %s180
      %s195 = sphi 0, %s181
      %s199 = sphi 0, %s199
      %s201 = sphi 0, %s199
      %s202 = sphi 0, %s201
      %s216 = sphi 0, %s202
      %s220 = sphi 0, %s220
      %s222 = sphi 0, %s220
      %s223 = sphi 0, %s222
      %s237 = sphi 0, %s223
      %s241 = sphi 0, %s241
      %s243 = sphi 0, %s241
      %s244 = sphi 0, %s243
      %s258 = sphi 0, %s244
      %s262 = sphi 0, %s262
      %s264 = sphi 0, %s262
      %s265 = sphi 0, %s264
      %s279 = sphi 0, %s265
      %s283 = sphi 0, %s283
      %s285 = sphi 0, %s283
      %s286 = sphi 0, %s285
      %s300 = sphi 0, %s286
      %s304 = sphi 0, %s304
      %s306 = sphi 0, %s304
      %s307 = sphi 0, %s306
      %s321 = sphi 0, %s307
      %s325 = sphi 0, %s325
      %s327 = sphi 0, %s325
      %s328 = sphi 0, %s327
      %s342 = sphi 0, %s328
      %s346 = sphi 0, %s346
      %s348 = sphi 0, %s346
      %s349 = sphi 0, %s348
      %s363 = sphi 0, %s349
      %s367 = sphi 0, %s367
      %s369 = sphi 0, %s367
      %s370 = sphi 0, %s369
      %s384 = sphi 0, %s370
      %s388 = sphi 0, %s388
      %s390 = sphi 0, %s388
      %s391 = sphi 0, %s390
      %s405 = sphi 0, %s391
      %s409 = sphi 0, %s409
      %s411 = sphi 0, %s409
      %s412 = sphi 0, %s411
      %s426 = sphi 0, %s412
      %s430 = sphi 0, %s430
      %s432 = sphi 0, %s430
      %s433 = sphi 0, %s432
      %s447 = sphi 0, %s433
      %s451 = sphi 0, %s451
      %s453 = sphi 0, %s451
      %s454 = sphi 0, %s453
      %s468 = sphi 0, %s454
      %s474 = sphi 0, %s476
      %s477 = sphi 0, %s474
      %s478 = sphi 0, %s477
      %s494 = sphi 0, %s478
      %s500 = sphi 0, %s502
      %s503 = sphi 0, %s500
      %s504 = sphi 0, %s503
      %s520 = sphi 0, %s504
    $region4: #{bert_encoder_forward.1} parent=1 // loop_header_branch
      %37 = sbr.rel (%p35) target = $region8
    $region5: #{bert_encoder_forward.1} parent=1 // loop_body
      %s39 = ssub.s32 %s34, 1
      %s40 = ssub.s32 %s34, 2
      %s41 = sadd.s32 %s34, 1
      %s42 = ssub.s32 %s34, %s41
      %p43 = scmp.eq.s32.totalorder %s42, 0
      %s45 = sadd.s32 %s44, 1
      %s46 = scalar_select %p43, %s44, %s45
      %p49 = pneg %p43
      %p50 = scmp.eq.s32.totalorder %s34, 1
      %p51 = por %p49, %p50
      %p52 = scmp.ne.s32.totalorder %s44, %s47
      %p53 = scmp.eq.s32.totalorder %s34, 0
      %p54 = por %p52, %p53
      %p55 = scmp.ne.s32.totalorder %s44, %s47
      %p56 = scmp.eq.s32.totalorder %s39, 1
      %p57 = por %p55, %p56
      %p58 = scmp.ne.s32.totalorder %s47, %s48
      %p59 = scmp.eq.s32.totalorder %s39, 0
      %p60 = por %p58, %p59
      %p61 = scmp.ne.s32.totalorder %s47, %s48
      %p62 = scmp.eq.s32.totalorder %s40, 1
      %p63 = por %p61, %p62
      %p65 = scmp.ne.s32.totalorder %s48, %s64
      %p66 = scmp.eq.s32.totalorder %s40, 0
      %p67 = por %p65, %p66
      %s68 = ssub.s32 %s34, %s41
      %p69 = scmp.eq.s32.totalorder %s68, 0
      %s71 = sadd.s32 %s70, 1
      %s72 = scalar_select %p69, %s70, %s71
      %p75 = pneg %p69
      %p76 = scmp.eq.s32.totalorder %s34, 1
      %p77 = por %p75, %p76
      %p78 = scmp.ne.s32.totalorder %s70, %s73
      %p79 = scmp.eq.s32.totalorder %s34, 0
      %p80 = por %p78, %p79
      %p81 = scmp.ne.s32.totalorder %s70, %s73
      %p82 = scmp.eq.s32.totalorder %s39, 1
      %p83 = por %p81, %p82
      %p84 = scmp.ne.s32.totalorder %s73, %s74
      %p85 = scmp.eq.s32.totalorder %s39, 0
      %p86 = por %p84, %p85
      %p87 = scmp.ne.s32.totalorder %s73, %s74
      %p88 = scmp.eq.s32.totalorder %s40, 1
      %p89 = por %p87, %p88
      %p91 = scmp.ne.s32.totalorder %s74, %s90
      %p92 = scmp.eq.s32.totalorder %s40, 0
      %p93 = por %p91, %p92
      %s95 = sadd.s32 %s94, 1
      %p98 = scmp.eq.s32.totalorder %s34, 1
      %p99 = scmp.ne.s32.totalorder %s94, %s96
      %p100 = scmp.eq.s32.totalorder %s34, 0
      %p101 = por %p99, %p100
      %p102 = scmp.ne.s32.totalorder %s94, %s96
      %p103 = scmp.eq.s32.totalorder %s39, 1
      %p104 = por %p102, %p103
      %p105 = scmp.ne.s32.totalorder %s96, %s97
      %p106 = scmp.eq.s32.totalorder %s39, 0
      %p107 = por %p105, %p106
      %p108 = scmp.ne.s32.totalorder %s96, %s97
      %p109 = scmp.eq.s32.totalorder %s40, 1
      %p110 = por %p108, %p109
      %p112 = scmp.ne.s32.totalorder %s97, %s111
      %p113 = scmp.eq.s32.totalorder %s40, 0
      %p114 = por %p112, %p113
      %s116 = sadd.s32 %s115, 1
      %p119 = scmp.eq.s32.totalorder %s34, 1
      %p120 = scmp.ne.s32.totalorder %s115, %s117
      %p121 = scmp.eq.s32.totalorder %s34, 0
      %p122 = por %p120, %p121
      %p123 = scmp.ne.s32.totalorder %s115, %s117
      %p124 = scmp.eq.s32.totalorder %s39, 1
      %p125 = por %p123, %p124
      %p126 = scmp.ne.s32.totalorder %s117, %s118
      %p127 = scmp.eq.s32.totalorder %s39, 0
      %p128 = por %p126, %p127
      %p129 = scmp.ne.s32.totalorder %s117, %s118
      %p130 = scmp.eq.s32.totalorder %s40, 1
      %p131 = por %p129, %p130
      %p133 = scmp.ne.s32.totalorder %s118, %s132
      %p134 = scmp.eq.s32.totalorder %s40, 0
      %p135 = por %p133, %p134
      %s137 = sadd.s32 %s136, 1
      %p140 = scmp.eq.s32.totalorder %s34, 1
      %p141 = scmp.ne.s32.totalorder %s136, %s138
      %p142 = scmp.eq.s32.totalorder %s34, 0
      %p143 = por %p141, %p142
      %p144 = scmp.ne.s32.totalorder %s136, %s138
      %p145 = scmp.eq.s32.totalorder %s39, 1
      %p146 = por %p144, %p145
      %p147 = scmp.ne.s32.totalorder %s138, %s139
      %p148 = scmp.eq.s32.totalorder %s39, 0
      %p149 = por %p147, %p148
      %p150 = scmp.ne.s32.totalorder %s138, %s139
      %p151 = scmp.eq.s32.totalorder %s40, 1
      %p152 = por %p150, %p151
      %p154 = scmp.ne.s32.totalorder %s139, %s153
      %p155 = scmp.eq.s32.totalorder %s40, 0
      %p156 = por %p154, %p155
      %s158 = sadd.s32 %s157, 1
      %p161 = scmp.eq.s32.totalorder %s34, 1
      %p162 = scmp.ne.s32.totalorder %s157, %s159
      %p163 = scmp.eq.s32.totalorder %s34, 0
      %p164 = por %p162, %p163
      %p165 = scmp.ne.s32.totalorder %s157, %s159
      %p166 = scmp.eq.s32.totalorder %s39, 1
      %p167 = por %p165, %p166
      %p168 = scmp.ne.s32.totalorder %s159, %s160
      %p169 = scmp.eq.s32.totalorder %s39, 0
      %p170 = por %p168, %p169
      %p171 = scmp.ne.s32.totalorder %s159, %s160
      %p172 = scmp.eq.s32.totalorder %s40, 1
      %p173 = por %p171, %p172
      %p175 = scmp.ne.s32.totalorder %s160, %s174
      %p176 = scmp.eq.s32.totalorder %s40, 0
      %p177 = por %p175, %p176
      %s179 = sadd.s32 %s178, 1
      %p182 = scmp.eq.s32.totalorder %s34, 1
      %p183 = scmp.ne.s32.totalorder %s178, %s180
      %p184 = scmp.eq.s32.totalorder %s34, 0
      %p185 = por %p183, %p184
      %p186 = scmp.ne.s32.totalorder %s178, %s180
      %p187 = scmp.eq.s32.totalorder %s39, 1
      %p188 = por %p186, %p187
      %p189 = scmp.ne.s32.totalorder %s180, %s181
      %p190 = scmp.eq.s32.totalorder %s39, 0
      %p191 = por %p189, %p190
      %p192 = scmp.ne.s32.totalorder %s180, %s181
      %p193 = scmp.eq.s32.totalorder %s40, 1
      %p194 = por %p192, %p193
      %p196 = scmp.ne.s32.totalorder %s181, %s195
      %p197 = scmp.eq.s32.totalorder %s40, 0
      %p198 = por %p196, %p197
      %s200 = sadd.s32 %s199, 1
      %p203 = scmp.eq.s32.totalorder %s34, 1
      %p204 = scmp.ne.s32.totalorder %s199, %s201
      %p205 = scmp.eq.s32.totalorder %s34, 0
      %p206 = por %p204, %p205
      %p207 = scmp.ne.s32.totalorder %s199, %s201
      %p208 = scmp.eq.s32.totalorder %s39, 1
      %p209 = por %p207, %p208
      %p210 = scmp.ne.s32.totalorder %s201, %s202
      %p211 = scmp.eq.s32.totalorder %s39, 0
      %p212 = por %p210, %p211
      %p213 = scmp.ne.s32.totalorder %s201, %s202
      %p214 = scmp.eq.s32.totalorder %s40, 1
      %p215 = por %p213, %p214
      %p217 = scmp.ne.s32.totalorder %s202, %s216
      %p218 = scmp.eq.s32.totalorder %s40, 0
      %p219 = por %p217, %p218
      %s221 = sadd.s32 %s220, 1
      %p224 = scmp.eq.s32.totalorder %s34, 1
      %p225 = scmp.ne.s32.totalorder %s220, %s222
      %p226 = scmp.eq.s32.totalorder %s34, 0
      %p227 = por %p225, %p226
      %p228 = scmp.ne.s32.totalorder %s220, %s222
      %p229 = scmp.eq.s32.totalorder %s39, 1
      %p230 = por %p228, %p229
      %p231 = scmp.ne.s32.totalorder %s222, %s223
      %p232 = scmp.eq.s32.totalorder %s39, 0
      %p233 = por %p231, %p232
      %p234 = scmp.ne.s32.totalorder %s222, %s223
      %p235 = scmp.eq.s32.totalorder %s40, 1
      %p236 = por %p234, %p235
      %p238 = scmp.ne.s32.totalorder %s223, %s237
      %p239 = scmp.eq.s32.totalorder %s40, 0
      %p240 = por %p238, %p239
      %s242 = sadd.s32 %s241, 1
      %p245 = scmp.eq.s32.totalorder %s34, 1
      %p246 = scmp.ne.s32.totalorder %s241, %s243
      %p247 = scmp.eq.s32.totalorder %s34, 0
      %p248 = por %p246, %p247
      %p249 = scmp.ne.s32.totalorder %s241, %s243
      %p250 = scmp.eq.s32.totalorder %s39, 1
      %p251 = por %p249, %p250
      %p252 = scmp.ne.s32.totalorder %s243, %s244
      %p253 = scmp.eq.s32.totalorder %s39, 0
      %p254 = por %p252, %p253
      %p255 = scmp.ne.s32.totalorder %s243, %s244
      %p256 = scmp.eq.s32.totalorder %s40, 1
      %p257 = por %p255, %p256
      %p259 = scmp.ne.s32.totalorder %s244, %s258
      %p260 = scmp.eq.s32.totalorder %s40, 0
      %p261 = por %p259, %p260
      %s263 = sadd.s32 %s262, 1
      %p266 = scmp.eq.s32.totalorder %s34, 1
      %p267 = scmp.ne.s32.totalorder %s262, %s264
      %p268 = scmp.eq.s32.totalorder %s34, 0
      %p269 = por %p267, %p268
      %p270 = scmp.ne.s32.totalorder %s262, %s264
      %p271 = scmp.eq.s32.totalorder %s39, 1
      %p272 = por %p270, %p271
      %p273 = scmp.ne.s32.totalorder %s264, %s265
      %p274 = scmp.eq.s32.totalorder %s39, 0
      %p275 = por %p273, %p274
      %p276 = scmp.ne.s32.totalorder %s264, %s265
      %p277 = scmp.eq.s32.totalorder %s40, 1
      %p278 = por %p276, %p277
      %p280 = scmp.ne.s32.totalorder %s265, %s279
      %p281 = scmp.eq.s32.totalorder %s40, 0
      %p282 = por %p280, %p281
      %s284 = sadd.s32 %s283, 1
      %p287 = scmp.eq.s32.totalorder %s34, 1
      %p288 = scmp.ne.s32.totalorder %s283, %s285
      %p289 = scmp.eq.s32.totalorder %s34, 0
      %p290 = por %p288, %p289
      %p291 = scmp.ne.s32.totalorder %s283, %s285
      %p292 = scmp.eq.s32.totalorder %s39, 1
      %p293 = por %p291, %p292
      %p294 = scmp.ne.s32.totalorder %s285, %s286
      %p295 = scmp.eq.s32.totalorder %s39, 0
      %p296 = por %p294, %p295
      %p297 = scmp.ne.s32.totalorder %s285, %s286
      %p298 = scmp.eq.s32.totalorder %s40, 1
      %p299 = por %p297, %p298
      %p301 = scmp.ne.s32.totalorder %s286, %s300
      %p302 = scmp.eq.s32.totalorder %s40, 0
      %p303 = por %p301, %p302
      %s305 = sadd.s32 %s304, 1
      %p308 = scmp.eq.s32.totalorder %s34, 1
      %p309 = scmp.ne.s32.totalorder %s304, %s306
      %p310 = scmp.eq.s32.totalorder %s34, 0
      %p311 = por %p309, %p310
      %p312 = scmp.ne.s32.totalorder %s304, %s306
      %p313 = scmp.eq.s32.totalorder %s39, 1
      %p314 = por %p312, %p313
      %p315 = scmp.ne.s32.totalorder %s306, %s307
      %p316 = scmp.eq.s32.totalorder %s39, 0
      %p317 = por %p315, %p316
      %p318 = scmp.ne.s32.totalorder %s306, %s307
      %p319 = scmp.eq.s32.totalorder %s40, 1
      %p320 = por %p318, %p319
      %p322 = scmp.ne.s32.totalorder %s307, %s321
      %p323 = scmp.eq.s32.totalorder %s40, 0
      %p324 = por %p322, %p323
      %s326 = sadd.s32 %s325, 1
      %p329 = scmp.eq.s32.totalorder %s34, 1
      %p330 = scmp.ne.s32.totalorder %s325, %s327
      %p331 = scmp.eq.s32.totalorder %s34, 0
      %p332 = por %p330, %p331
      %p333 = scmp.ne.s32.totalorder %s325, %s327
      %p334 = scmp.eq.s32.totalorder %s39, 1
      %p335 = por %p333, %p334
      %p336 = scmp.ne.s32.totalorder %s327, %s328
      %p337 = scmp.eq.s32.totalorder %s39, 0
      %p338 = por %p336, %p337
      %p339 = scmp.ne.s32.totalorder %s327, %s328
      %p340 = scmp.eq.s32.totalorder %s40, 1
      %p341 = por %p339, %p340
      %p343 = scmp.ne.s32.totalorder %s328, %s342
      %p344 = scmp.eq.s32.totalorder %s40, 0
      %p345 = por %p343, %p344
      %s347 = sadd.s32 %s346, 1
      %p350 = scmp.eq.s32.totalorder %s34, 1
      %p351 = scmp.ne.s32.totalorder %s346, %s348
      %p352 = scmp.eq.s32.totalorder %s34, 0
      %p353 = por %p351, %p352
      %p354 = scmp.ne.s32.totalorder %s346, %s348
      %p355 = scmp.eq.s32.totalorder %s39, 1
      %p356 = por %p354, %p355
      %p357 = scmp.ne.s32.totalorder %s348, %s349
      %p358 = scmp.eq.s32.totalorder %s39, 0
      %p359 = por %p357, %p358
      %p360 = scmp.ne.s32.totalorder %s348, %s349
      %p361 = scmp.eq.s32.totalorder %s40, 1
      %p362 = por %p360, %p361
      %p364 = scmp.ne.s32.totalorder %s349, %s363
      %p365 = scmp.eq.s32.totalorder %s40, 0
      %p366 = por %p364, %p365
      %s368 = sadd.s32 %s367, 1
      %p371 = scmp.eq.s32.totalorder %s34, 1
      %p372 = scmp.ne.s32.totalorder %s367, %s369
      %p373 = scmp.eq.s32.totalorder %s34, 0
      %p374 = por %p372, %p373
      %p375 = scmp.ne.s32.totalorder %s367, %s369
      %p376 = scmp.eq.s32.totalorder %s39, 1
      %p377 = por %p375, %p376
      %p378 = scmp.ne.s32.totalorder %s369, %s370
      %p379 = scmp.eq.s32.totalorder %s39, 0
      %p380 = por %p378, %p379
      %p381 = scmp.ne.s32.totalorder %s369, %s370
      %p382 = scmp.eq.s32.totalorder %s40, 1
      %p383 = por %p381, %p382
      %p385 = scmp.ne.s32.totalorder %s370, %s384
      %p386 = scmp.eq.s32.totalorder %s40, 0
      %p387 = por %p385, %p386
      %s389 = sadd.s32 %s388, 1
      %p392 = scmp.eq.s32.totalorder %s34, 1
      %p393 = scmp.ne.s32.totalorder %s388, %s390
      %p394 = scmp.eq.s32.totalorder %s34, 0
      %p395 = por %p393, %p394
      %p396 = scmp.ne.s32.totalorder %s388, %s390
      %p397 = scmp.eq.s32.totalorder %s39, 1
      %p398 = por %p396, %p397
      %p399 = scmp.ne.s32.totalorder %s390, %s391
      %p400 = scmp.eq.s32.totalorder %s39, 0
      %p401 = por %p399, %p400
      %p402 = scmp.ne.s32.totalorder %s390, %s391
      %p403 = scmp.eq.s32.totalorder %s40, 1
      %p404 = por %p402, %p403
      %p406 = scmp.ne.s32.totalorder %s391, %s405
      %p407 = scmp.eq.s32.totalorder %s40, 0
      %p408 = por %p406, %p407
      %s410 = sadd.s32 %s409, 1
      %p413 = scmp.eq.s32.totalorder %s34, 1
      %p414 = scmp.ne.s32.totalorder %s409, %s411
      %p415 = scmp.eq.s32.totalorder %s34, 0
      %p416 = por %p414, %p415
      %p417 = scmp.ne.s32.totalorder %s409, %s411
      %p418 = scmp.eq.s32.totalorder %s39, 1
      %p419 = por %p417, %p418
      %p420 = scmp.ne.s32.totalorder %s411, %s412
      %p421 = scmp.eq.s32.totalorder %s39, 0
      %p422 = por %p420, %p421
      %p423 = scmp.ne.s32.totalorder %s411, %s412
      %p424 = scmp.eq.s32.totalorder %s40, 1
      %p425 = por %p423, %p424
      %p427 = scmp.ne.s32.totalorder %s412, %s426
      %p428 = scmp.eq.s32.totalorder %s40, 0
      %p429 = por %p427, %p428
      %s431 = sadd.s32 %s430, 1
      %p434 = scmp.eq.s32.totalorder %s34, 1
      %p435 = scmp.ne.s32.totalorder %s430, %s432
      %p436 = scmp.eq.s32.totalorder %s34, 0
      %p437 = por %p435, %p436
      %p438 = scmp.ne.s32.totalorder %s430, %s432
      %p439 = scmp.eq.s32.totalorder %s39, 1
      %p440 = por %p438, %p439
      %p441 = scmp.ne.s32.totalorder %s432, %s433
      %p442 = scmp.eq.s32.totalorder %s39, 0
      %p443 = por %p441, %p442
      %p444 = scmp.ne.s32.totalorder %s432, %s433
      %p445 = scmp.eq.s32.totalorder %s40, 1
      %p446 = por %p444, %p445
      %p448 = scmp.ne.s32.totalorder %s433, %s447
      %p449 = scmp.eq.s32.totalorder %s40, 0
      %p450 = por %p448, %p449
      %s452 = sadd.s32 %s451, 1
      %p455 = scmp.eq.s32.totalorder %s34, 1
      %p456 = scmp.ne.s32.totalorder %s451, %s453
      %p457 = scmp.eq.s32.totalorder %s34, 0
      %p458 = por %p456, %p457
      %p459 = scmp.ne.s32.totalorder %s451, %s453
      %p460 = scmp.eq.s32.totalorder %s39, 1
      %p461 = por %p459, %p460
      %p462 = scmp.ne.s32.totalorder %s453, %s454
      %p463 = scmp.eq.s32.totalorder %s39, 0
      %p464 = por %p462, %p463
      %p465 = scmp.ne.s32.totalorder %s453, %s454
      %p466 = scmp.eq.s32.totalorder %s40, 1
      %p467 = por %p465, %p466
      %p469 = scmp.ne.s32.totalorder %s454, %s468
      %p470 = scmp.eq.s32.totalorder %s40, 0
      %p471 = por %p469, %p470
      %s472 = ssub.s32 %s34, %s41
      %p473 = scmp.eq.s32.totalorder %s472, 0
      %s475 = sadd.s32 %s474, 1
      %s476 = scalar_select %p473, %s474, %s475
      %p479 = pneg %p473
      %p480 = scmp.eq.s32.totalorder %s34, 1
      %p481 = por %p479, %p480
      %p482 = scmp.ne.s32.totalorder %s474, %s477
      %p483 = scmp.eq.s32.totalorder %s34, 0
      %p484 = por %p482, %p483
      %p485 = scmp.ne.s32.totalorder %s474, %s477
      %p486 = scmp.eq.s32.totalorder %s39, 1
      %p487 = por %p485, %p486
      %p488 = scmp.ne.s32.totalorder %s477, %s478
      %p489 = scmp.eq.s32.totalorder %s39, 0
      %p490 = por %p488, %p489
      %p491 = scmp.ne.s32.totalorder %s477, %s478
      %p492 = scmp.eq.s32.totalorder %s40, 1
      %p493 = por %p491, %p492
      %p495 = scmp.ne.s32.totalorder %s478, %s494
      %p496 = scmp.eq.s32.totalorder %s40, 0
      %p497 = por %p495, %p496
      %s498 = ssub.s32 %s34, %s41
      %p499 = scmp.eq.s32.totalorder %s498, 0
      %s501 = sadd.s32 %s500, 1
      %s502 = scalar_select %p499, %s500, %s501
      %p505 = pneg %p499
      %p506 = scmp.eq.s32.totalorder %s34, 1
      %p507 = por %p505, %p506
      %p508 = scmp.ne.s32.totalorder %s500, %s503
      %p509 = scmp.eq.s32.totalorder %s34, 0
      %p510 = por %p508, %p509
      %p511 = scmp.ne.s32.totalorder %s500, %s503
      %p512 = scmp.eq.s32.totalorder %s39, 1
      %p513 = por %p511, %p512
      %p514 = scmp.ne.s32.totalorder %s503, %s504
      %p515 = scmp.eq.s32.totalorder %s39, 0
      %p516 = por %p514, %p515
      %p517 = scmp.ne.s32.totalorder %s503, %s504
      %p518 = scmp.eq.s32.totalorder %s40, 1
      %p519 = por %p517, %p518
      %p521 = scmp.ne.s32.totalorder %s504, %s520
      %p522 = scmp.eq.s32.totalorder %s40, 0
      %p523 = por %p521, %p522
      %p524 = scmp.le.s32.totalorder 1, %s34
      %p525 = scmp.lt.s32.totalorder %s34, 3
      %p526 = pnand %p524, %p525
      %p527 = pneg %p526
      // Predicated region
      $region9: #{bert_encoder_forward.1} parent=5 // pred_check
        _
      $region10: #{bert_encoder_forward.1} parent=5 // pred_check_branch
        %529 = sbr.rel (%p526) target = $region12
      $region11: #{bert_encoder_forward.1} parent=5 // pred_region
        %s530 = ssub.s32 %s34, 1
        // Predicated region
        $region13: #{bert_encoder_forward.1} parent=11 // pred_check
          %p531 = pneg %p107
        $region14: #{bert_encoder_forward.1} parent=11 // pred_check_branch
          %533 = sbr.rel (%p531) target = $region16
        $region15: #{bert_encoder_forward.1} parent=11 // pred_region
          _
        $region16: #{bert_encoder_forward.1} parent=11 // pred_fallthru
          _
        // Predicated region
        $region17: #{bert_encoder_forward.1} parent=11 // pred_check
          %p534 = pneg %p128
        $region18: #{bert_encoder_forward.1} parent=11 // pred_check_branch
          %536 = sbr.rel (%p534) target = $region20
        $region19: #{bert_encoder_forward.1} parent=11 // pred_region
          _
        $region20: #{bert_encoder_forward.1} parent=11 // pred_fallthru
          _
        // Predicated region
        $region21: #{bert_encoder_forward.1} parent=11 // pred_check
          %p537 = pneg %p149
        $region22: #{bert_encoder_forward.1} parent=11 // pred_check_branch
          %539 = sbr.rel (%p537) target = $region24
        $region23: #{bert_encoder_forward.1} parent=11 // pred_region
          _
        $region24: #{bert_encoder_forward.1} parent=11 // pred_fallthru
          _
        // Predicated region
        $region25: #{bert_encoder_forward.1} parent=11 // pred_check
          %p540 = pneg %p170
        $region26: #{bert_encoder_forward.1} parent=11 // pred_check_branch
          %542 = sbr.rel (%p540) target = $region28
        $region27: #{bert_encoder_forward.1} parent=11 // pred_region
          _
        $region28: #{bert_encoder_forward.1} parent=11 // pred_fallthru
          _
        // Predicated region
        $region29: #{bert_encoder_forward.1} parent=11 // pred_check
          %p543 = pneg %p191
        $region30: #{bert_encoder_forward.1} parent=11 // pred_check_branch
          %545 = sbr.rel (%p543) target = $region32
        $region31: #{bert_encoder_forward.1} parent=11 // pred_region
          _
        $region32: #{bert_encoder_forward.1} parent=11 // pred_fallthru
          _
        // Predicated region
        $region33: #{bert_encoder_forward.1} parent=11 // pred_check
          %p546 = pneg %p212
        $region34: #{bert_encoder_forward.1} parent=11 // pred_check_branch
          %548 = sbr.rel (%p546) target = $region36
        $region35: #{bert_encoder_forward.1} parent=11 // pred_region
          _
        $region36: #{bert_encoder_forward.1} parent=11 // pred_fallthru
          _
        // Predicated region
        $region37: #{bert_encoder_forward.1} parent=11 // pred_check
          %p549 = pneg %p233
        $region38: #{bert_encoder_forward.1} parent=11 // pred_check_branch
          %551 = sbr.rel (%p549) target = $region40
        $region39: #{bert_encoder_forward.1} parent=11 // pred_region
          _
        $region40: #{bert_encoder_forward.1} parent=11 // pred_fallthru
          _
        // Predicated region
        $region41: #{bert_encoder_forward.1} parent=11 // pred_check
          %p552 = pneg %p254
        $region42: #{bert_encoder_forward.1} parent=11 // pred_check_branch
          %554 = sbr.rel (%p552) target = $region44
        $region43: #{bert_encoder_forward.1} parent=11 // pred_region
          _
        $region44: #{bert_encoder_forward.1} parent=11 // pred_fallthru
          _
        // Predicated region
        $region45: #{bert_encoder_forward.1} parent=11 // pred_check
          %p555 = pneg %p275
        $region46: #{bert_encoder_forward.1} parent=11 // pred_check_branch
          %557 = sbr.rel (%p555) target = $region48
        $region47: #{bert_encoder_forward.1} parent=11 // pred_region
          _
        $region48: #{bert_encoder_forward.1} parent=11 // pred_fallthru
          _
        // Predicated region
        $region49: #{bert_encoder_forward.1} parent=11 // pred_check
          %p558 = pneg %p296
        $region50: #{bert_encoder_forward.1} parent=11 // pred_check_branch
          %560 = sbr.rel (%p558) target = $region52
        $region51: #{bert_encoder_forward.1} parent=11 // pred_region
          _
        $region52: #{bert_encoder_forward.1} parent=11 // pred_fallthru
          _
        // Predicated region
        $region53: #{bert_encoder_forward.1} parent=11 // pred_check
          %p561 = pneg %p317
        $region54: #{bert_encoder_forward.1} parent=11 // pred_check_branch
          %563 = sbr.rel (%p561) target = $region56
        $region55: #{bert_encoder_forward.1} parent=11 // pred_region
          _
        $region56: #{bert_encoder_forward.1} parent=11 // pred_fallthru
          _
        // Predicated region
        $region57: #{bert_encoder_forward.1} parent=11 // pred_check
          %p564 = pneg %p338
        $region58: #{bert_encoder_forward.1} parent=11 // pred_check_branch
          %566 = sbr.rel (%p564) target = $region60
        $region59: #{bert_encoder_forward.1} parent=11 // pred_region
          _
        $region60: #{bert_encoder_forward.1} parent=11 // pred_fallthru
          _
        // Predicated region
        $region61: #{bert_encoder_forward.1} parent=11 // pred_check
          %p567 = pneg %p359
        $region62: #{bert_encoder_forward.1} parent=11 // pred_check_branch
          %569 = sbr.rel (%p567) target = $region64
        $region63: #{bert_encoder_forward.1} parent=11 // pred_region
          _
        $region64: #{bert_encoder_forward.1} parent=11 // pred_fallthru
          _
        // Predicated region
        $region65: #{bert_encoder_forward.1} parent=11 // pred_check
          %p570 = pneg %p380
        $region66: #{bert_encoder_forward.1} parent=11 // pred_check_branch
          %572 = sbr.rel (%p570) target = $region68
        $region67: #{bert_encoder_forward.1} parent=11 // pred_region
          _
        $region68: #{bert_encoder_forward.1} parent=11 // pred_fallthru
          _
        // Predicated region
        $region69: #{bert_encoder_forward.1} parent=11 // pred_check
          %p573 = pneg %p401
        $region70: #{bert_encoder_forward.1} parent=11 // pred_check_branch
          %575 = sbr.rel (%p573) target = $region72
        $region71: #{bert_encoder_forward.1} parent=11 // pred_region
          _
        $region72: #{bert_encoder_forward.1} parent=11 // pred_fallthru
          _
        // Predicated region
        $region73: #{bert_encoder_forward.1} parent=11 // pred_check
          %p576 = pneg %p422
        $region74: #{bert_encoder_forward.1} parent=11 // pred_check_branch
          %578 = sbr.rel (%p576) target = $region76
        $region75: #{bert_encoder_forward.1} parent=11 // pred_region
          _
        $region76: #{bert_encoder_forward.1} parent=11 // pred_fallthru
          _
        // Predicated region
        $region77: #{bert_encoder_forward.1} parent=11 // pred_check
          %p579 = pneg %p443
        $region78: #{bert_encoder_forward.1} parent=11 // pred_check_branch
          %581 = sbr.rel (%p579) target = $region80
        $region79: #{bert_encoder_forward.1} parent=11 // pred_region
          _
        $region80: #{bert_encoder_forward.1} parent=11 // pred_fallthru
          _
        // Predicated region
        $region81: #{bert_encoder_forward.1} parent=11 // pred_check
          %p582 = pneg %p464
        $region82: #{bert_encoder_forward.1} parent=11 // pred_check_branch
          %584 = sbr.rel (%p582) target = $region84
        $region83: #{bert_encoder_forward.1} parent=11 // pred_region
          _
        $region84: #{bert_encoder_forward.1} parent=11 // pred_fallthru
          _
      $region12: #{bert_encoder_forward.1} parent=5 // pred_fallthru
        _
      %p585 = scmp.lt.s32.totalorder %s34, 2
      // Predicated region
      $region85: #{bert_encoder_forward.1} parent=5 // pred_check
        %p586 = pneg %p585
      $region86: #{bert_encoder_forward.1} parent=5 // pred_check_branch
        %588 = sbr.rel (%p586) target = $region88
      $region87: #{bert_encoder_forward.1} parent=5 // pred_region
        // Predicated region
        $region89: #{bert_encoder_forward.1} parent=87 // pred_check
          %p589 = pneg %p54
        $region90: #{bert_encoder_forward.1} parent=87 // pred_check_branch
          %591 = sbr.rel (%p589) target = $region92
        $region91: #{bert_encoder_forward.1} parent=87 // pred_region
          %p592 = scmp.lt.s32.totalorder %s34, 1
          %s593 = scalar_select %p592, %s34, 1
          %s594 = smul.addr %s593, 8
          %s595 = scalar_lea.vmem %s0, %s594
        $region92: #{bert_encoder_forward.1} parent=87 // pred_fallthru
          _
        // Predicated region
        $region93: #{bert_encoder_forward.1} parent=87 // pred_check
          %p596 = pneg %p80
        $region94: #{bert_encoder_forward.1} parent=87 // pred_check_branch
          %598 = sbr.rel (%p596) target = $region96
        $region95: #{bert_encoder_forward.1} parent=87 // pred_region
          %p599 = scmp.lt.s32.totalorder %s34, 1
          %s600 = scalar_select %p599, %s34, 1
          %s601 = scalar_lea.vmem %s1, %s600
        $region96: #{bert_encoder_forward.1} parent=87 // pred_fallthru
          _
      $region88: #{bert_encoder_forward.1} parent=5 // pred_fallthru
        _
      %p602 = scmp.le.s32.totalorder 1, %s34
      %p603 = scmp.lt.s32.totalorder %s34, 3
      %p604 = pnand %p602, %p603
      %p605 = pneg %p604
      // Predicated region
      $region97: #{bert_encoder_forward.1} parent=5 // pred_check
        _
      $region98: #{bert_encoder_forward.1} parent=5 // pred_check_branch
        %607 = sbr.rel (%p604) target = $region100
      $region99: #{bert_encoder_forward.1} parent=5 // pred_region
        %s608 = ssub.s32 %s34, 1
        %p609 = scmp.lt.s32.totalorder %s39, 1
        %s610 = scalar_select %p609, %s39, 1
        %s611 = smul.addr %s610, 8
        %s612 = scalar_lea.vmem %s0, %s611
        %p613 = pneg %p60
        %p614 = pneg %p57
        %p615 = scmp.lt.s32.totalorder %s39, 1
        %s616 = scalar_select %p615, %s39, 1
        %s617 = scalar_lea.vmem %s1, %s616
        %p618 = pneg %p86
        %p619 = pneg %p83
        %p620 = pneg %p107
        %p621 = pneg %p104
        %p622 = pneg %p128
        %p623 = pneg %p125
        %p624 = pneg %p149
        %p625 = pneg %p146
        %p626 = pneg %p170
        %p627 = pneg %p167
        %p628 = pneg %p191
        %p629 = pneg %p188
        %p630 = pneg %p212
        %p631 = pneg %p209
        %p632 = pneg %p233
        %p633 = pneg %p230
        %p634 = pneg %p254
        %p635 = pneg %p251
        %p636 = pneg %p275
        %p637 = pneg %p272
        %p638 = pneg %p296
        %p639 = pneg %p293
        %p640 = pneg %p317
        %p641 = pneg %p314
        %p642 = pneg %p338
        %p643 = pneg %p335
        %p644 = pneg %p359
        %p645 = pneg %p356
        %p646 = pneg %p380
        %p647 = pneg %p377
        %p648 = pneg %p401
        %p649 = pneg %p398
        %p650 = pneg %p422
        %p651 = pneg %p419
        %p652 = pneg %p443
        %p653 = pneg %p440
        %p654 = pneg %p464
        %p655 = pneg %p461
        %p656 = pneg %p490
        %p657 = pneg %p487
        %s658 = sand.u32 %s477, 1
        %s659 = scalar_lea.sflag [#allocation3], %s658
        %s660 = sand.u32 %s477, 1
        %s661 = smul.addr %s660, 8
        %s662 = scalar_lea.vmem [#allocation2], %s661
        %p663 = pneg %p516
        %p664 = pneg %p513
        %s665 = sand.u32 %s503, 1
        %s666 = scalar_lea.sflag [#allocation5], %s665
        %s667 = sand.u32 %s503, 1
        %s668 = scalar_lea.vmem [#allocation4], %s667
        %p669 = scmp.lt.s32.totalorder %s39, 1
        %s670 = scalar_select %p669, %s39, 1
        %s671 = smul.addr %s670, 8
        %s672 = scalar_lea.vmem %s0, %s671
        %p673 = scmp.lt.s32.totalorder %s39, 1
        %s674 = scalar_select %p673, %s39, 1
        %s675 = scalar_lea.vmem %s1, %s674
        %v676 = vld [vmem:[%s672] sm:$0xff]
        %v677 = vld [vmem:[%s675] sm:$0x1]
        %v678 = vld [vmem:[%s2] sm:$0x1]
        %v679 = vld [vmem:[%s3] sm:$0x1]
        %vm680 = vcmask 261120
        %v681 = vsel %vm680, %v676, 0.0
        %682 = vadd.xlane.f32.xlu0 %v681
        %v683 = vpop.xlane.xlu0 %682
        %v684 = vrcp.pop 32.0
        %v685 = vmul.f32 32.0, %v684
        %v686 = vsub.f32 1.0, %v685
        %v687 = vmul.f32 %v684, %v686
        %v688 = vadd.f32 %v684, %v687
        %vm689 = vweird.f32 %v684
        %v690 = vsel %vm689, %v684, %v688
        %v691 = vmul.f32 %v683, %v690
        %v692 = vsub.f32 %v676, %v691
        %v693 = vmul.f32 %v692, %v692
        %v694 = vsel %vm680, %v693, 0.0
        %695 = vadd.xlane.f32.xlu0 %v694
        %v696 = vpop.xlane.xlu0 %695
        %v697 = vmul.f32 %v696, %v690
        %v698 = vadd.f32 %v697, 1e-12
        %v699 = vrsqrt.pop %v698
        %v700 = vmul.f32 %v699, %v698
        %v701 = vmul.f32 %v700, %v699
        %v702 = vmul.f32 0.5, %v701
        %v703 = vsub.f32 1.5, %v702
        %v704 = vmul.f32 %v699, %v703
        %vm705 = vweird.f32 %v698
        %vm706 = vweird.f32 %v699
        %vm707 = vmor %vm705, %vm706
        %v708 = vsel %vm707, %v699, %v704
        %v709 = vmul.f32 %v692, %v708
        %v711 = vperm.slane %v678, 0
        %v713 = vmul.f32 %v709, %v711
        %v715 = vperm.slane %v679, 0
        %v717 = vadd.f32 %v713, %v715
        %v718 = vld [vmem:[%s4] sm:$0xff]
        %v719 = vld [vmem:[%s4 + $0x8] sm:$0xff]
        %v720 = vld [vmem:[%s4 + $0x10] sm:$0xff]
        %v721 = vld [vmem:[%s4 + $0x18] sm:$0xff]
        %v722 = vld [vmem:[%s5] sm:$0x1]
        %v724 = vperm.slane %v722, 0
        %v727 = vsel %vm680, %v717, 0
        %729 = vmatpush.msra.mxu0 0.0
        %730 = vmatpush.msra.mxu0 0.0
        %731 = vmatpush.msra.mxu0 0.0
        %732 = vmatpush.msra.mxu0 0.0
        %733 = vmatpush.msra.mxu0 0.0
        %734 = vmatpush.msra.mxu0 0.0
        %735 = vmatpush.msra.mxu0 0.0
        %736 = vmatpush.msra.mxu0 0.0
        %737 = vmatpush.msra.mxu0 0.0
        %738 = vmatpush.msra.mxu0 0.0
        %739 = vmatpush.msra.mxu0 0.0
        %740 = vmatpush.msra.mxu0 0.0
        %741 = vmatpush.msra.mxu0 %v721
        %742 = vmatpush.msra.mxu0 %v720
        %743 = vmatpush.msra.mxu0 %v719
        %744 = vmatpush.msra.mxu0 %v718
        %745 = vmatmul.f32.gmra.mxu0 %v727
        %v746 = vpop.f32.mrf.mxu0
        %v747 = vadd.f32 %v724, %v746
        %748 = vdwg.mxu0
        %750 = vrot.lane.b32.xlu0 %v747, 96
        %v751 = vpop.permute.xlu0 %750
        %vm752 = vcmask 64512
        %v753 = vsel %vm752, %v747, 0
        %v755 = vsel %vm752, %v751, 0
        %757 = vmatpush.xpose.msra.mxu0 0.0
        %758 = vmatpush.xpose.msra.mxu0 0.0
        %759 = vmatpush.xpose.msra.mxu0 0.0
        %760 = vmatpush.xpose.msra.mxu0 0.0
        %761 = vmatpush.xpose.msra.mxu0 0.0
        %762 = vmatpush.xpose.msra.mxu0 0.0
        %763 = vmatpush.xpose.msra.mxu0 0.0
        %764 = vmatpush.xpose.msra.mxu0 0.0
        %765 = vmatpush.xpose.msra.mxu0 0.0
        %766 = vmatpush.xpose.msra.mxu0 0.0
        %767 = vmatpush.xpose.msra.mxu0 0.0
        %768 = vmatpush.xpose.msra.mxu0 0.0
        %769 = vmatpush.xpose.msra.mxu0 0.0
        %770 = vmatpush.xpose.msra.mxu0 0.0
        %771 = vmatpush.xpose.msra.mxu0 0.0
        %772 = vmatpush.xpose.msra.mxu0 %v755
        %773 = vmatmul.f32.gmra.mxu0 %v753
        %v774 = vpop.f32.mrf.mxu0
        %v775 = vadd.f32 0.0, %v774
        %776 = vdwg.mxu0
        %v777 = vmul.f32 %v775, 0.35355338
        %v779 = vperm.slane %v677, 0
        %v781 = vadd.f32 %v777, %v779
        %v782 = vsel %vm752, %v781, -inf
        %783 = vmax.xlane.f32.xlu0 %v782
        %v784 = vpop.xlane.xlu0 %783
        %v785 = vsub.f32 %v781, %v784
        %v786 = vmul.f32 %v785, 1.442695
        %v787 = vpow.pop %v786
        %v788 = vsel %vm752, %v787, 0.0
        %789 = vadd.xlane.f32.xlu0 %v788
        %v790 = vpop.xlane.xlu0 %789
        %v791 = vrcp.pop %v790
        %v792 = vmul.f32 %v787, %v791
        %793 = vrot.lane.b32.xlu0 %v747, 64
        %v794 = vpop.permute.xlu0 %793
        %v797 = vsel %vm752, %v792, 0
        %799 = vmatpush.msra.mxu0 0.0
        %800 = vmatpush.msra.mxu0 0.0
        %801 = vmatpush.msra.mxu0 0.0
        %802 = vmatpush.msra.mxu0 0.0
        %803 = vmatpush.msra.mxu0 0.0
        %804 = vmatpush.msra.mxu0 0.0
        %805 = vmatpush.msra.mxu0 0.0
        %806 = vmatpush.msra.mxu0 0.0
        %807 = vmatpush.msra.mxu0 0.0
        %808 = vmatpush.msra.mxu0 0.0
        %809 = vmatpush.msra.mxu0 0.0
        %810 = vmatpush.msra.mxu0 0.0
        %811 = vmatpush.msra.mxu0 0.0
        %812 = vmatpush.msra.mxu0 0.0
        %813 = vmatpush.msra.mxu0 0.0
        %814 = vmatpush.msra.mxu0 %v794
        %815 = vmatmul.f32.gmra.mxu0 %v797
        %v816 = vpop.f32.mrf.mxu0
        %v817 = vadd.f32 0.0, %v816
        %818 = vdwg.mxu0
        %819 = vrot.lane.b32.xlu0 %v747, 120
        %v820 = vpop.permute.xlu0 %819
        %821 = vrot.lane.b32.xlu0 %v747, 88
        %v822 = vpop.permute.xlu0 %821
        %v823 = vsel %vm752, %v820, 0
        %v825 = vsel %vm752, %v822, 0
        %827 = vmatpush.xpose.msra.mxu0 0.0
        %828 = vmatpush.xpose.msra.mxu0 0.0
        %829 = vmatpush.xpose.msra.mxu0 0.0
        %830 = vmatpush.xpose.msra.mxu0 0.0
        %831 = vmatpush.xpose.msra.mxu0 0.0
        %832 = vmatpush.xpose.msra.mxu0 0.0
        %833 = vmatpush.xpose.msra.mxu0 0.0
        %834 = vmatpush.xpose.msra.mxu0 0.0
        %835 = vmatpush.xpose.msra.mxu0 0.0
        %836 = vmatpush.xpose.msra.mxu0 0.0
        %837 = vmatpush.xpose.msra.mxu0 0.0
        %838 = vmatpush.xpose.msra.mxu0 0.0
        %839 = vmatpush.xpose.msra.mxu0 0.0
        %840 = vmatpush.xpose.msra.mxu0 0.0
        %841 = vmatpush.xpose.msra.mxu0 0.0
        %842 = vmatpush.xpose.msra.mxu0 %v825
        %843 = vmatmul.f32.gmra.mxu0 %v823
        %v844 = vpop.f32.mrf.mxu0
        %v845 = vadd.f32 0.0, %v844
        %846 = vdwg.mxu0
        %v847 = vmul.f32 %v845, 0.35355338
        %v848 = vadd.f32 %v847, %v779
        %v849 = vsel %vm752, %v848, -inf
        %850 = vmax.xlane.f32.xlu0 %v849
        %v851 = vpop.xlane.xlu0 %850
        %v852 = vsub.f32 %v848, %v851
        %v853 = vmul.f32 %v852, 1.442695
        %v854 = vpow.pop %v853
        %v855 = vsel %vm752, %v854, 0.0
        %856 = vadd.xlane.f32.xlu0 %v855
        %v857 = vpop.xlane.xlu0 %856
        %v858 = vrcp.pop %v857
        %v859 = vmul.f32 %v854, %v858
        %860 = vrot.lane.b32.xlu0 %v747, 56
        %v861 = vpop.permute.xlu0 %860
        %v864 = vsel %vm752, %v859, 0
        %866 = vmatpush.msra.mxu0 0.0
        %867 = vmatpush.msra.mxu0 0.0
        %868 = vmatpush.msra.mxu0 0.0
        %869 = vmatpush.msra.mxu0 0.0
        %870 = vmatpush.msra.mxu0 0.0
        %871 = vmatpush.msra.mxu0 0.0
        %872 = vmatpush.msra.mxu0 0.0
        %873 = vmatpush.msra.mxu0 0.0
        %874 = vmatpush.msra.mxu0 0.0
        %875 = vmatpush.msra.mxu0 0.0
        %876 = vmatpush.msra.mxu0 0.0
        %877 = vmatpush.msra.mxu0 0.0
        %878 = vmatpush.msra.mxu0 0.0
        %879 = vmatpush.msra.mxu0 0.0
        %880 = vmatpush.msra.mxu0 0.0
        %881 = vmatpush.msra.mxu0 %v861
        %882 = vmatmul.f32.gmra.mxu0 %v864
        %v883 = vpop.f32.mrf.mxu0
        %v884 = vadd.f32 0.0, %v883
        %885 = vdwg.mxu0
        %886 = vrot.lane.b32.xlu0 %v747, 112
        %v887 = vpop.permute.xlu0 %886
        %888 = vrot.lane.b32.xlu0 %v747, 80
        %v889 = vpop.permute.xlu0 %888
        %v890 = vsel %vm752, %v887, 0
        %v892 = vsel %vm752, %v889, 0
        %894 = vmatpush.xpose.msra.mxu0 0.0
        %895 = vmatpush.xpose.msra.mxu0 0.0
        %896 = vmatpush.xpose.msra.mxu0 0.0
        %897 = vmatpush.xpose.msra.mxu0 0.0
        %898 = vmatpush.xpose.msra.mxu0 0.0
        %899 = vmatpush.xpose.msra.mxu0 0.0
        %900 = vmatpush.xpose.msra.mxu0 0.0
        %901 = vmatpush.xpose.msra.mxu0 0.0
        %902 = vmatpush.xpose.msra.mxu0 0.0
        %903 = vmatpush.xpose.msra.mxu0 0.0
        %904 = vmatpush.xpose.msra.mxu0 0.0
        %905 = vmatpush.xpose.msra.mxu0 0.0
        %906 = vmatpush.xpose.msra.mxu0 0.0
        %907 = vmatpush.xpose.msra.mxu0 0.0
        %908 = vmatpush.xpose.msra.mxu0 0.0
        %909 = vmatpush.xpose.msra.mxu0 %v892
        %910 = vmatmul.f32.gmra.mxu0 %v890
        %v911 = vpop.f32.mrf.mxu0
        %v912 = vadd.f32 0.0, %v911
        %913 = vdwg.mxu0
        %v914 = vmul.f32 %v912, 0.35355338
        %v915 = vadd.f32 %v914, %v779
        %v916 = vsel %vm752, %v915, -inf
        %917 = vmax.xlane.f32.xlu0 %v916
        %v918 = vpop.xlane.xlu0 %917
        %v919 = vsub.f32 %v915, %v918
        %v920 = vmul.f32 %v919, 1.442695
        %v921 = vpow.pop %v920
        %v922 = vsel %vm752, %v921, 0.0
        %923 = vadd.xlane.f32.xlu0 %v922
        %v924 = vpop.xlane.xlu0 %923
        %v925 = vrcp.pop %v924
        %v926 = vmul.f32 %v921, %v925
        %927 = vrot.lane.b32.xlu0 %v747, 48
        %v928 = vpop.permute.xlu0 %927
        %v931 = vsel %vm752, %v926, 0
        %933 = vmatpush.msra.mxu0 0.0
        %934 = vmatpush.msra.mxu0 0.0
        %935 = vmatpush.msra.mxu0 0.0
        %936 = vmatpush.msra.mxu0 0.0
        %937 = vmatpush.msra.mxu0 0.0
        %938 = vmatpush.msra.mxu0 0.0
        %939 = vmatpush.msra.mxu0 0.0
        %940 = vmatpush.msra.mxu0 0.0
        %941 = vmatpush.msra.mxu0 0.0
        %942 = vmatpush.msra.mxu0 0.0
        %943 = vmatpush.msra.mxu0 0.0
        %944 = vmatpush.msra.mxu0 0.0
        %945 = vmatpush.msra.mxu0 0.0
        %946 = vmatpush.msra.mxu0 0.0
        %947 = vmatpush.msra.mxu0 0.0
        %948 = vmatpush.msra.mxu0 %v928
        %949 = vmatmul.f32.gmra.mxu0 %v931
        %v950 = vpop.f32.mrf.mxu0
        %v951 = vadd.f32 0.0, %v950
        %952 = vdwg.mxu0
        %953 = vrot.lane.b32.xlu0 %v747, 104
        %v954 = vpop.permute.xlu0 %953
        %955 = vrot.lane.b32.xlu0 %v747, 72
        %v956 = vpop.permute.xlu0 %955
        %v957 = vsel %vm752, %v954, 0
        %v959 = vsel %vm752, %v956, 0
        %961 = vmatpush.xpose.msra.mxu0 0.0
        %962 = vmatpush.xpose.msra.mxu0 0.0
        %963 = vmatpush.xpose.msra.mxu0 0.0
        %964 = vmatpush.xpose.msra.mxu0 0.0
        %965 = vmatpush.xpose.msra.mxu0 0.0
        %966 = vmatpush.xpose.msra.mxu0 0.0
        %967 = vmatpush.xpose.msra.mxu0 0.0
        %968 = vmatpush.xpose.msra.mxu0 0.0
        %969 = vmatpush.xpose.msra.mxu0 0.0
        %970 = vmatpush.xpose.msra.mxu0 0.0
        %971 = vmatpush.xpose.msra.mxu0 0.0
        %972 = vmatpush.xpose.msra.mxu0 0.0
        %973 = vmatpush.xpose.msra.mxu0 0.0
        %974 = vmatpush.xpose.msra.mxu0 0.0
        %975 = vmatpush.xpose.msra.mxu0 0.0
        %976 = vmatpush.xpose.msra.mxu0 %v959
        %977 = vmatmul.f32.gmra.mxu0 %v957
        %v978 = vpop.f32.mrf.mxu0
        %v979 = vadd.f32 0.0, %v978
        %980 = vdwg.mxu0
        %v981 = vmul.f32 %v979, 0.35355338
        %v982 = vadd.f32 %v981, %v779
        %v983 = vsel %vm752, %v982, -inf
        %984 = vmax.xlane.f32.xlu0 %v983
        %v985 = vpop.xlane.xlu0 %984
        %v986 = vsub.f32 %v982, %v985
        %v987 = vmul.f32 %v986, 1.442695
        %v988 = vpow.pop %v987
        %v989 = vsel %vm752, %v988, 0.0
        %990 = vadd.xlane.f32.xlu0 %v989
        %v991 = vpop.xlane.xlu0 %990
        %v992 = vrcp.pop %v991
        %v993 = vmul.f32 %v988, %v992
        %994 = vrot.lane.b32.xlu0 %v747, 40
        %v995 = vpop.permute.xlu0 %994
        %v998 = vsel %vm752, %v993, 0
        %1000 = vmatpush.msra.mxu0 0.0
        %1001 = vmatpush.msra.mxu0 0.0
        %1002 = vmatpush.msra.mxu0 0.0
        %1003 = vmatpush.msra.mxu0 0.0
        %1004 = vmatpush.msra.mxu0 0.0
        %1005 = vmatpush.msra.mxu0 0.0
        %1006 = vmatpush.msra.mxu0 0.0
        %1007 = vmatpush.msra.mxu0 0.0
        %1008 = vmatpush.msra.mxu0 0.0
        %1009 = vmatpush.msra.mxu0 0.0
        %1010 = vmatpush.msra.mxu0 0.0
        %1011 = vmatpush.msra.mxu0 0.0
        %1012 = vmatpush.msra.mxu0 0.0
        %1013 = vmatpush.msra.mxu0 0.0
        %1014 = vmatpush.msra.mxu0 0.0
        %1015 = vmatpush.msra.mxu0 %v995
        %1016 = vmatmul.f32.gmra.mxu0 %v998
        %v1017 = vpop.f32.mrf.mxu0
        %v1018 = vadd.f32 0.0, %v1017
        %1019 = vdwg.mxu0
        %1021 = vrot.lane.b32.xlu0 %v884, 8
        %v1022 = vpop.permute.xlu0 %1021
        %1025 = vrot.lane.b32.xlu0 %v951, 16
        %v1026 = vpop.permute.xlu0 %1025
        %1029 = vrot.lane.b32.xlu0 %v1018, 24
        %v1030 = vpop.permute.xlu0 %1029
        %v1032 = vsel %vm752, %v817, %v1022
        %vm1033 = vcmask 130048
        %v1034 = vsel %vm1033, %v1032, %v1026
        %vm1035 = vcmask 195584
        %v1036 = vsel %vm1035, %v1034, %v1030
        %v1037 = vld [vmem:[%s6] sm:$0xff]
        %v1038 = vld [vmem:[%s6 + $0x8] sm:$0xff]
        %v1039 = vld [vmem:[%s6 + $0x10] sm:$0xff]
        %v1040 = vld [vmem:[%s6 + $0x18] sm:$0xff]
        %v1041 = vld [vmem:[%s7] sm:$0x1]
        %v1043 = vperm.slane %v1041, 0
        %v1046 = vsel %vm680, %v1036, 0
        %1048 = vmatpush.msra.mxu0 0.0
        %1049 = vmatpush.msra.mxu0 0.0
        %1050 = vmatpush.msra.mxu0 0.0
        %1051 = vmatpush.msra.mxu0 0.0
        %1052 = vmatpush.msra.mxu0 0.0
        %1053 = vmatpush.msra.mxu0 0.0
        %1054 = vmatpush.msra.mxu0 0.0
        %1055 = vmatpush.msra.mxu0 0.0
        %1056 = vmatpush.msra.mxu0 0.0
        %1057 = vmatpush.msra.mxu0 0.0
        %1058 = vmatpush.msra.mxu0 0.0
        %1059 = vmatpush.msra.mxu0 0.0
        %1060 = vmatpush.msra.mxu0 %v1040
        %1061 = vmatpush.msra.mxu0 %v1039
        %1062 = vmatpush.msra.mxu0 %v1038
        %1063 = vmatpush.msra.mxu0 %v1037
        %1064 = vmatmul.f32.gmra.mxu0 %v1046
        %v1065 = vpop.f32.mrf.mxu0
        %v1066 = vadd.f32 %v1043, %v1065
        %1067 = vdwg.mxu0
        %v1068 = vadd.f32 %v1066, %v717
        %v1069 = vld [vmem:[%s8] sm:$0x1]
        %v1070 = vld [vmem:[%s9] sm:$0x1]
        %v1071 = vsel %vm680, %v1068, 0.0
        %1072 = vadd.xlane.f32.xlu0 %v1071
        %v1073 = vpop.xlane.xlu0 %1072
        %v1074 = vmul.f32 %v1073, %v690
        %v1075 = vsub.f32 %v1068, %v1074
        %v1076 = vmul.f32 %v1075, %v1075
        %v1077 = vsel %vm680, %v1076, 0.0
        %1078 = vadd.xlane.f32.xlu0 %v1077
        %v1079 = vpop.xlane.xlu0 %1078
        %v1080 = vmul.f32 %v1079, %v690
        %v1081 = vadd.f32 %v1080, 1e-12
        %v1082 = vrsqrt.pop %v1081
        %v1083 = vmul.f32 %v1082, %v1081
        %v1084 = vmul.f32 %v1083, %v1082
        %v1085 = vmul.f32 0.5, %v1084
        %v1086 = vsub.f32 1.5, %v1085
        %v1087 = vmul.f32 %v1082, %v1086
        %vm1088 = vweird.f32 %v1081
        %vm1089 = vweird.f32 %v1082
        %vm1090 = vmor %vm1088, %vm1089
        %v1091 = vsel %vm1090, %v1082, %v1087
        %v1092 = vmul.f32 %v1075, %v1091
        %v1094 = vperm.slane %v1069, 0
        %v1096 = vmul.f32 %v1092, %v1094
        %v1098 = vperm.slane %v1070, 0
        %v1100 = vadd.f32 %v1096, %v1098
        %v1101 = vld [vmem:[%s10] sm:$0xff]
        %v1102 = vld [vmem:[%s10 + $0x8] sm:$0xff]
        %v1103 = vld [vmem:[%s10 + $0x10] sm:$0xff]
        %v1104 = vld [vmem:[%s10 + $0x18] sm:$0xff]
        %v1105 = vld [vmem:[%s11] sm:$0x1]
        %v1107 = vperm.slane %v1105, 0
        %v1110 = vsel %vm680, %v1100, 0
        %1112 = vmatpush.msra.mxu0 0.0
        %1113 = vmatpush.msra.mxu0 0.0
        %1114 = vmatpush.msra.mxu0 0.0
        %1115 = vmatpush.msra.mxu0 0.0
        %1116 = vmatpush.msra.mxu0 0.0
        %1117 = vmatpush.msra.mxu0 0.0
        %1118 = vmatpush.msra.mxu0 0.0
        %1119 = vmatpush.msra.mxu0 0.0
        %1120 = vmatpush.msra.mxu0 0.0
        %1121 = vmatpush.msra.mxu0 0.0
        %1122 = vmatpush.msra.mxu0 0.0
        %1123 = vmatpush.msra.mxu0 0.0
        %1124 = vmatpush.msra.mxu0 %v1104
        %1125 = vmatpush.msra.mxu0 %v1103
        %1126 = vmatpush.msra.mxu0 %v1102
        %1127 = vmatpush.msra.mxu0 %v1101
        %1128 = vmatmul.f32.gmra.mxu0 %v1110
        %v1129 = vpop.f32.mrf.mxu0
        %v1130 = vadd.f32 %v1107, %v1129
        %1131 = vdwg.mxu0
        %v1132 = vmul.f32 %v1130, 0.5
        %v1133 = vmul.f32 %v1130, %v1130
        %v1134 = vmul.f32 %v1133, %v1130
        %v1135 = vmul.f32 %v1134, 0.044715
        %v1136 = vadd.f32 %v1130, %v1135
        %v1137 = vmul.f32 %v1136, 0.7978846
        %v1138 = vtanh.pop %v1137
        %v1139 = vadd.f32 %v1138, 1.0
        %v1140 = vmul.f32 %v1132, %v1139
        %v1141 = vld [vmem:[%s12] sm:$0xff]
        %v1142 = vld [vmem:[%s12 + $0x8] sm:$0xff]
        %v1143 = vld [vmem:[%s12 + $0x10] sm:$0xff]
        %v1144 = vld [vmem:[%s12 + $0x18] sm:$0xff]
        %v1145 = vld [vmem:[%s12 + $0x20] sm:$0xff]
        %v1146 = vld [vmem:[%s12 + $0x28] sm:$0xff]
        %v1147 = vld [vmem:[%s12 + $0x30] sm:$0xff]
        %v1148 = vld [vmem:[%s12 + $0x38] sm:$0xff]
        %v1149 = vld [vmem:[%s13] sm:$0x1]
        %v1151 = vperm.slane %v1149, 0
        %vm1153 = vcmask 523264
        %v1155 = vsel %vm1153, %v1140, 0
        %1157 = vmatpush.msra.mxu0 0.0
        %1158 = vmatpush.msra.mxu0 0.0
        %1159 = vmatpush.msra.mxu0 0.0
        %1160 = vmatpush.msra.mxu0 0.0
        %1161 = vmatpush.msra.mxu0 0.0
        %1162 = vmatpush.msra.mxu0 0.0
        %1163 = vmatpush.msra.mxu0 0.0
        %1164 = vmatpush.msra.mxu0 0.0
        %1165 = vmatpush.msra.mxu0 %v1148
        %1166 = vmatpush.msra.mxu0 %v1147
        %1167 = vmatpush.msra.mxu0 %v1146
        %1168 = vmatpush.msra.mxu0 %v1145
        %1169 = vmatpush.msra.mxu0 %v1144
        %1170 = vmatpush.msra.mxu0 %v1143
        %1171 = vmatpush.msra.mxu0 %v1142
        %1172 = vmatpush.msra.mxu0 %v1141
        %1173 = vmatmul.f32.gmra.mxu0 %v1155
        %v1174 = vpop.f32.mrf.mxu0
        %v1175 = vadd.f32 %v1151, %v1174
        %1176 = vdwg.mxu0
        %v1177 = vadd.f32 %v1175, %v1100
        %v1178 = vld [vmem:[%s14] sm:$0x1]
        %v1179 = vld [vmem:[%s15] sm:$0x1]
        %v1180 = vsel %vm680, %v1177, 0.0
        %1181 = vadd.xlane.f32.xlu0 %v1180
        %v1182 = vpop.xlane.xlu0 %1181
        %v1183 = vmul.f32 %v1182, %v690
        %v1184 = vsub.f32 %v1177, %v1183
        %v1185 = vmul.f32 %v1184, %v1184
        %v1186 = vsel %vm680, %v1185, 0.0
        %1187 = vadd.xlane.f32.xlu0 %v1186
        %v1188 = vpop.xlane.xlu0 %1187
        %v1189 = vmul.f32 %v1188, %v690
        %v1190 = vadd.f32 %v1189, 1e-12
        %v1191 = vrsqrt.pop %v1190
        %v1192 = vmul.f32 %v1191, %v1190
        %v1193 = vmul.f32 %v1192, %v1191
        %v1194 = vmul.f32 0.5, %v1193
        %v1195 = vsub.f32 1.5, %v1194
        %v1196 = vmul.f32 %v1191, %v1195
        %vm1197 = vweird.f32 %v1190
        %vm1198 = vweird.f32 %v1191
        %vm1199 = vmor %vm1197, %vm1198
        %v1200 = vsel %vm1199, %v1191, %v1196
        %v1201 = vmul.f32 %v1184, %v1200
        %v1203 = vperm.slane %v1178, 0
        %v1205 = vmul.f32 %v1201, %v1203
        %v1207 = vperm.slane %v1179, 0
        %v1209 = vadd.f32 %v1205, %v1207
        %s1210 = scalar_lea.vmem %s4, 32
        %v1211 = vld [vmem:[%s1210] sm:$0xff]
        %v1212 = vld [vmem:[%s1210 + $0x8] sm:$0xff]
        %v1213 = vld [vmem:[%s1210 + $0x10] sm:$0xff]
        %v1214 = vld [vmem:[%s1210 + $0x18] sm:$0xff]
        %s1215 = scalar_lea.vmem %s5, 1
        %v1216 = vld [vmem:[%s1215] sm:$0x1]
        %v1218 = vperm.slane %v1216, 0
        %v1221 = vsel %vm680, %v1209, 0
        %1223 = vmatpush.msra.mxu0 0.0
        %1224 = vmatpush.msra.mxu0 0.0
        %1225 = vmatpush.msra.mxu0 0.0
        %1226 = vmatpush.msra.mxu0 0.0
        %1227 = vmatpush.msra.mxu0 0.0
        %1228 = vmatpush.msra.mxu0 0.0
        %1229 = vmatpush.msra.mxu0 0.0
        %1230 = vmatpush.msra.mxu0 0.0
        %1231 = vmatpush.msra.mxu0 0.0
        %1232 = vmatpush.msra.mxu0 0.0
        %1233 = vmatpush.msra.mxu0 0.0
        %1234 = vmatpush.msra.mxu0 0.0
        %1235 = vmatpush.msra.mxu0 %v1214
        %1236 = vmatpush.msra.mxu0 %v1213
        %1237 = vmatpush.msra.mxu0 %v1212
        %1238 = vmatpush.msra.mxu0 %v1211
        %1239 = vmatmul.f32.gmra.mxu0 %v1221
        %v1240 = vpop.f32.mrf.mxu0
        %v1241 = vadd.f32 %v1218, %v1240
        %1242 = vdwg.mxu0
        %1244 = vrot.lane.b32.xlu0 %v1241, 96
        %v1245 = vpop.permute.xlu0 %1244
        %v1246 = vsel %vm752, %v1241, 0
        %v1248 = vsel %vm752, %v1245, 0
        %1250 = vmatpush.xpose.msra.mxu0 0.0
        %1251 = vmatpush.xpose.msra.mxu0 0.0
        %1252 = vmatpush.xpose.msra.mxu0 0.0
        %1253 = vmatpush.xpose.msra.mxu0 0.0
        %1254 = vmatpush.xpose.msra.mxu0 0.0
        %1255 = vmatpush.xpose.msra.mxu0 0.0
        %1256 = vmatpush.xpose.msra.mxu0 0.0
        %1257 = vmatpush.xpose.msra.mxu0 0.0
        %1258 = vmatpush.xpose.msra.mxu0 0.0
        %1259 = vmatpush.xpose.msra.mxu0 0.0
        %1260 = vmatpush.xpose.msra.mxu0 0.0
        %1261 = vmatpush.xpose.msra.mxu0 0.0
        %1262 = vmatpush.xpose.msra.mxu0 0.0
        %1263 = vmatpush.xpose.msra.mxu0 0.0
        %1264 = vmatpush.xpose.msra.mxu0 0.0
        %1265 = vmatpush.xpose.msra.mxu0 %v1248
        %1266 = vmatmul.f32.gmra.mxu0 %v1246
        %v1267 = vpop.f32.mrf.mxu0
        %v1268 = vadd.f32 0.0, %v1267
        %1269 = vdwg.mxu0
        %v1270 = vmul.f32 %v1268, 0.35355338
        %v1271 = vadd.f32 %v1270, %v779
        %v1272 = vsel %vm752, %v1271, -inf
        %1273 = vmax.xlane.f32.xlu0 %v1272
        %v1274 = vpop.xlane.xlu0 %1273
        %v1275 = vsub.f32 %v1271, %v1274
        %v1276 = vmul.f32 %v1275, 1.442695
        %v1277 = vpow.pop %v1276
        %v1278 = vsel %vm752, %v1277, 0.0
        %1279 = vadd.xlane.f32.xlu0 %v1278
        %v1280 = vpop.xlane.xlu0 %1279
        %v1281 = vrcp.pop %v1280
        %v1282 = vmul.f32 %v1277, %v1281
        %1283 = vrot.lane.b32.xlu0 %v1241, 64
        %v1284 = vpop.permute.xlu0 %1283
        %v1287 = vsel %vm752, %v1282, 0
        %1289 = vmatpush.msra.mxu0 0.0
        %1290 = vmatpush.msra.mxu0 0.0
        %1291 = vmatpush.msra.mxu0 0.0
        %1292 = vmatpush.msra.mxu0 0.0
        %1293 = vmatpush.msra.mxu0 0.0
        %1294 = vmatpush.msra.mxu0 0.0
        %1295 = vmatpush.msra.mxu0 0.0
        %1296 = vmatpush.msra.mxu0 0.0
        %1297 = vmatpush.msra.mxu0 0.0
        %1298 = vmatpush.msra.mxu0 0.0
        %1299 = vmatpush.msra.mxu0 0.0
        %1300 = vmatpush.msra.mxu0 0.0
        %1301 = vmatpush.msra.mxu0 0.0
        %1302 = vmatpush.msra.mxu0 0.0
        %1303 = vmatpush.msra.mxu0 0.0
        %1304 = vmatpush.msra.mxu0 %v1284
        %1305 = vmatmul.f32.gmra.mxu0 %v1287
        %v1306 = vpop.f32.mrf.mxu0
        %v1307 = vadd.f32 0.0, %v1306
        %1308 = vdwg.mxu0
        %1309 = vrot.lane.b32.xlu0 %v1241, 120
        %v1310 = vpop.permute.xlu0 %1309
        %1311 = vrot.lane.b32.xlu0 %v1241, 88
        %v1312 = vpop.permute.xlu0 %1311
        %v1313 = vsel %vm752, %v1310, 0
        %v1315 = vsel %vm752, %v1312, 0
        %1317 = vmatpush.xpose.msra.mxu0 0.0
        %1318 = vmatpush.xpose.msra.mxu0 0.0
        %1319 = vmatpush.xpose.msra.mxu0 0.0
        %1320 = vmatpush.xpose.msra.mxu0 0.0
        %1321 = vmatpush.xpose.msra.mxu0 0.0
        %1322 = vmatpush.xpose.msra.mxu0 0.0
        %1323 = vmatpush.xpose.msra.mxu0 0.0
        %1324 = vmatpush.xpose.msra.mxu0 0.0
        %1325 = vmatpush.xpose.msra.mxu0 0.0
        %1326 = vmatpush.xpose.msra.mxu0 0.0
        %1327 = vmatpush.xpose.msra.mxu0 0.0
        %1328 = vmatpush.xpose.msra.mxu0 0.0
        %1329 = vmatpush.xpose.msra.mxu0 0.0
        %1330 = vmatpush.xpose.msra.mxu0 0.0
        %1331 = vmatpush.xpose.msra.mxu0 0.0
        %1332 = vmatpush.xpose.msra.mxu0 %v1315
        %1333 = vmatmul.f32.gmra.mxu0 %v1313
        %v1334 = vpop.f32.mrf.mxu0
        %v1335 = vadd.f32 0.0, %v1334
        %1336 = vdwg.mxu0
        %v1337 = vmul.f32 %v1335, 0.35355338
        %v1338 = vadd.f32 %v1337, %v779
        %v1339 = vsel %vm752, %v1338, -inf
        %1340 = vmax.xlane.f32.xlu0 %v1339
        %v1341 = vpop.xlane.xlu0 %1340
        %v1342 = vsub.f32 %v1338, %v1341
        %v1343 = vmul.f32 %v1342, 1.442695
        %v1344 = vpow.pop %v1343
        %v1345 = vsel %vm752, %v1344, 0.0
        %1346 = vadd.xlane.f32.xlu0 %v1345
        %v1347 = vpop.xlane.xlu0 %1346
        %v1348 = vrcp.pop %v1347
        %v1349 = vmul.f32 %v1344, %v1348
        %1350 = vrot.lane.b32.xlu0 %v1241, 56
        %v1351 = vpop.permute.xlu0 %1350
        %v1354 = vsel %vm752, %v1349, 0
        %1356 = vmatpush.msra.mxu0 0.0
        %1357 = vmatpush.msra.mxu0 0.0
        %1358 = vmatpush.msra.mxu0 0.0
        %1359 = vmatpush.msra.mxu0 0.0
        %1360 = vmatpush.msra.mxu0 0.0
        %1361 = vmatpush.msra.mxu0 0.0
        %1362 = vmatpush.msra.mxu0 0.0
        %1363 = vmatpush.msra.mxu0 0.0
        %1364 = vmatpush.msra.mxu0 0.0
        %1365 = vmatpush.msra.mxu0 0.0
        %1366 = vmatpush.msra.mxu0 0.0
        %1367 = vmatpush.msra.mxu0 0.0
        %1368 = vmatpush.msra.mxu0 0.0
        %1369 = vmatpush.msra.mxu0 0.0
        %1370 = vmatpush.msra.mxu0 0.0
        %1371 = vmatpush.msra.mxu0 %v1351
        %1372 = vmatmul.f32.gmra.mxu0 %v1354
        %v1373 = vpop.f32.mrf.mxu0
        %v1374 = vadd.f32 0.0, %v1373
        %1375 = vdwg.mxu0
        %1376 = vrot.lane.b32.xlu0 %v1241, 112
        %v1377 = vpop.permute.xlu0 %1376
        %1378 = vrot.lane.b32.xlu0 %v1241, 80
        %v1379 = vpop.permute.xlu0 %1378
        %v1380 = vsel %vm752, %v1377, 0
        %v1382 = vsel %vm752, %v1379, 0
        %1384 = vmatpush.xpose.msra.mxu0 0.0
        %1385 = vmatpush.xpose.msra.mxu0 0.0
        %1386 = vmatpush.xpose.msra.mxu0 0.0
        %1387 = vmatpush.xpose.msra.mxu0 0.0
        %1388 = vmatpush.xpose.msra.mxu0 0.0
        %1389 = vmatpush.xpose.msra.mxu0 0.0
        %1390 = vmatpush.xpose.msra.mxu0 0.0
        %1391 = vmatpush.xpose.msra.mxu0 0.0
        %1392 = vmatpush.xpose.msra.mxu0 0.0
        %1393 = vmatpush.xpose.msra.mxu0 0.0
        %1394 = vmatpush.xpose.msra.mxu0 0.0
        %1395 = vmatpush.xpose.msra.mxu0 0.0
        %1396 = vmatpush.xpose.msra.mxu0 0.0
        %1397 = vmatpush.xpose.msra.mxu0 0.0
        %1398 = vmatpush.xpose.msra.mxu0 0.0
        %1399 = vmatpush.xpose.msra.mxu0 %v1382
        %1400 = vmatmul.f32.gmra.mxu0 %v1380
        %v1401 = vpop.f32.mrf.mxu0
        %v1402 = vadd.f32 0.0, %v1401
        %1403 = vdwg.mxu0
        %v1404 = vmul.f32 %v1402, 0.35355338
        %v1405 = vadd.f32 %v1404, %v779
        %v1406 = vsel %vm752, %v1405, -inf
        %1407 = vmax.xlane.f32.xlu0 %v1406
        %v1408 = vpop.xlane.xlu0 %1407
        %v1409 = vsub.f32 %v1405, %v1408
        %v1410 = vmul.f32 %v1409, 1.442695
        %v1411 = vpow.pop %v1410
        %v1412 = vsel %vm752, %v1411, 0.0
        %1413 = vadd.xlane.f32.xlu0 %v1412
        %v1414 = vpop.xlane.xlu0 %1413
        %v1415 = vrcp.pop %v1414
        %v1416 = vmul.f32 %v1411, %v1415
        %1417 = vrot.lane.b32.xlu0 %v1241, 48
        %v1418 = vpop.permute.xlu0 %1417
        %v1421 = vsel %vm752, %v1416, 0
        %1423 = vmatpush.msra.mxu0 0.0
        %1424 = vmatpush.msra.mxu0 0.0
        %1425 = vmatpush.msra.mxu0 0.0
        %1426 = vmatpush.msra.mxu0 0.0
        %1427 = vmatpush.msra.mxu0 0.0
        %1428 = vmatpush.msra.mxu0 0.0
        %1429 = vmatpush.msra.mxu0 0.0
        %1430 = vmatpush.msra.mxu0 0.0
        %1431 = vmatpush.msra.mxu0 0.0
        %1432 = vmatpush.msra.mxu0 0.0
        %1433 = vmatpush.msra.mxu0 0.0
        %1434 = vmatpush.msra.mxu0 0.0
        %1435 = vmatpush.msra.mxu0 0.0
        %1436 = vmatpush.msra.mxu0 0.0
        %1437 = vmatpush.msra.mxu0 0.0
        %1438 = vmatpush.msra.mxu0 %v1418
        %1439 = vmatmul.f32.gmra.mxu0 %v1421
        %v1440 = vpop.f32.mrf.mxu0
        %v1441 = vadd.f32 0.0, %v1440
        %1442 = vdwg.mxu0
        %1443 = vrot.lane.b32.xlu0 %v1241, 104
        %v1444 = vpop.permute.xlu0 %1443
        %1445 = vrot.lane.b32.xlu0 %v1241, 72
        %v1446 = vpop.permute.xlu0 %1445
        %v1447 = vsel %vm752, %v1444, 0
        %v1449 = vsel %vm752, %v1446, 0
        %1451 = vmatpush.xpose.msra.mxu0 0.0
        %1452 = vmatpush.xpose.msra.mxu0 0.0
        %1453 = vmatpush.xpose.msra.mxu0 0.0
        %1454 = vmatpush.xpose.msra.mxu0 0.0
        %1455 = vmatpush.xpose.msra.mxu0 0.0
        %1456 = vmatpush.xpose.msra.mxu0 0.0
        %1457 = vmatpush.xpose.msra.mxu0 0.0
        %1458 = vmatpush.xpose.msra.mxu0 0.0
        %1459 = vmatpush.xpose.msra.mxu0 0.0
        %1460 = vmatpush.xpose.msra.mxu0 0.0
        %1461 = vmatpush.xpose.msra.mxu0 0.0
        %1462 = vmatpush.xpose.msra.mxu0 0.0
        %1463 = vmatpush.xpose.msra.mxu0 0.0
        %1464 = vmatpush.xpose.msra.mxu0 0.0
        %1465 = vmatpush.xpose.msra.mxu0 0.0
        %1466 = vmatpush.xpose.msra.mxu0 %v1449
        %1467 = vmatmul.f32.gmra.mxu0 %v1447
        %v1468 = vpop.f32.mrf.mxu0
        %v1469 = vadd.f32 0.0, %v1468
        %1470 = vdwg.mxu0
        %v1471 = vmul.f32 %v1469, 0.35355338
        %v1472 = vadd.f32 %v1471, %v779
        %v1473 = vsel %vm752, %v1472, -inf
        %1474 = vmax.xlane.f32.xlu0 %v1473
        %v1475 = vpop.xlane.xlu0 %1474
        %v1476 = vsub.f32 %v1472, %v1475
        %v1477 = vmul.f32 %v1476, 1.442695
        %v1478 = vpow.pop %v1477
        %v1479 = vsel %vm752, %v1478, 0.0
        %1480 = vadd.xlane.f32.xlu0 %v1479
        %v1481 = vpop.xlane.xlu0 %1480
        %v1482 = vrcp.pop %v1481
        %v1483 = vmul.f32 %v1478, %v1482
        %1484 = vrot.lane.b32.xlu0 %v1241, 40
        %v1485 = vpop.permute.xlu0 %1484
        %v1488 = vsel %vm752, %v1483, 0
        %1490 = vmatpush.msra.mxu0 0.0
        %1491 = vmatpush.msra.mxu0 0.0
        %1492 = vmatpush.msra.mxu0 0.0
        %1493 = vmatpush.msra.mxu0 0.0
        %1494 = vmatpush.msra.mxu0 0.0
        %1495 = vmatpush.msra.mxu0 0.0
        %1496 = vmatpush.msra.mxu0 0.0
        %1497 = vmatpush.msra.mxu0 0.0
        %1498 = vmatpush.msra.mxu0 0.0
        %1499 = vmatpush.msra.mxu0 0.0
        %1500 = vmatpush.msra.mxu0 0.0
        %1501 = vmatpush.msra.mxu0 0.0
        %1502 = vmatpush.msra.mxu0 0.0
        %1503 = vmatpush.msra.mxu0 0.0
        %1504 = vmatpush.msra.mxu0 0.0
        %1505 = vmatpush.msra.mxu0 %v1485
        %1506 = vmatmul.f32.gmra.mxu0 %v1488
        %v1507 = vpop.f32.mrf.mxu0
        %v1508 = vadd.f32 0.0, %v1507
        %1509 = vdwg.mxu0
        %1511 = vrot.lane.b32.xlu0 %v1374, 8
        %v1512 = vpop.permute.xlu0 %1511
        %1515 = vrot.lane.b32.xlu0 %v1441, 16
        %v1516 = vpop.permute.xlu0 %1515
        %1519 = vrot.lane.b32.xlu0 %v1508, 24
        %v1520 = vpop.permute.xlu0 %1519
        %v1522 = vsel %vm752, %v1307, %v1512
        %v1523 = vsel %vm1033, %v1522, %v1516
        %v1524 = vsel %vm1035, %v1523, %v1520
        %s1525 = scalar_lea.vmem %s6, 32
        %v1526 = vld [vmem:[%s1525] sm:$0xff]
        %v1527 = vld [vmem:[%s1525 + $0x8] sm:$0xff]
        %v1528 = vld [vmem:[%s1525 + $0x10] sm:$0xff]
        %v1529 = vld [vmem:[%s1525 + $0x18] sm:$0xff]
        %s1530 = scalar_lea.vmem %s7, 1
        %v1531 = vld [vmem:[%s1530] sm:$0x1]
        %v1533 = vperm.slane %v1531, 0
        %v1536 = vsel %vm680, %v1524, 0
        %1538 = vmatpush.msra.mxu0 0.0
        %1539 = vmatpush.msra.mxu0 0.0
        %1540 = vmatpush.msra.mxu0 0.0
        %1541 = vmatpush.msra.mxu0 0.0
        %1542 = vmatpush.msra.mxu0 0.0
        %1543 = vmatpush.msra.mxu0 0.0
        %1544 = vmatpush.msra.mxu0 0.0
        %1545 = vmatpush.msra.mxu0 0.0
        %1546 = vmatpush.msra.mxu0 0.0
        %1547 = vmatpush.msra.mxu0 0.0
        %1548 = vmatpush.msra.mxu0 0.0
        %1549 = vmatpush.msra.mxu0 0.0
        %1550 = vmatpush.msra.mxu0 %v1529
        %1551 = vmatpush.msra.mxu0 %v1528
        %1552 = vmatpush.msra.mxu0 %v1527
        %1553 = vmatpush.msra.mxu0 %v1526
        %1554 = vmatmul.f32.gmra.mxu0 %v1536
        %v1555 = vpop.f32.mrf.mxu0
        %v1556 = vadd.f32 %v1533, %v1555
        %1557 = vdwg.mxu0
        %v1558 = vadd.f32 %v1556, %v1209
        %s1559 = scalar_lea.vmem %s8, 1
        %v1560 = vld [vmem:[%s1559] sm:$0x1]
        %s1561 = scalar_lea.vmem %s9, 1
        %v1562 = vld [vmem:[%s1561] sm:$0x1]
        %v1563 = vsel %vm680, %v1558, 0.0
        %1564 = vadd.xlane.f32.xlu0 %v1563
        %v1565 = vpop.xlane.xlu0 %1564
        %v1566 = vmul.f32 %v1565, %v690
        %v1567 = vsub.f32 %v1558, %v1566
        %v1568 = vmul.f32 %v1567, %v1567
        %v1569 = vsel %vm680, %v1568, 0.0
        %1570 = vadd.xlane.f32.xlu0 %v1569
        %v1571 = vpop.xlane.xlu0 %1570
        %v1572 = vmul.f32 %v1571, %v690
        %v1573 = vadd.f32 %v1572, 1e-12
        %v1574 = vrsqrt.pop %v1573
        %v1575 = vmul.f32 %v1574, %v1573
        %v1576 = vmul.f32 %v1575, %v1574
        %v1577 = vmul.f32 0.5, %v1576
        %v1578 = vsub.f32 1.5, %v1577
        %v1579 = vmul.f32 %v1574, %v1578
        %vm1580 = vweird.f32 %v1573
        %vm1581 = vweird.f32 %v1574
        %vm1582 = vmor %vm1580, %vm1581
        %v1583 = vsel %vm1582, %v1574, %v1579
        %v1584 = vmul.f32 %v1567, %v1583
        %v1586 = vperm.slane %v1560, 0
        %v1588 = vmul.f32 %v1584, %v1586
        %v1590 = vperm.slane %v1562, 0
        %v1592 = vadd.f32 %v1588, %v1590
        %s1593 = scalar_lea.vmem %s10, 32
        %v1594 = vld [vmem:[%s1593] sm:$0xff]
        %v1595 = vld [vmem:[%s1593 + $0x8] sm:$0xff]
        %v1596 = vld [vmem:[%s1593 + $0x10] sm:$0xff]
        %v1597 = vld [vmem:[%s1593 + $0x18] sm:$0xff]
        %s1598 = scalar_lea.vmem %s11, 1
        %v1599 = vld [vmem:[%s1598] sm:$0x1]
        %v1601 = vperm.slane %v1599, 0
        %v1604 = vsel %vm680, %v1592, 0
        %1606 = vmatpush.msra.mxu0 0.0
        %1607 = vmatpush.msra.mxu0 0.0
        %1608 = vmatpush.msra.mxu0 0.0
        %1609 = vmatpush.msra.mxu0 0.0
        %1610 = vmatpush.msra.mxu0 0.0
        %1611 = vmatpush.msra.mxu0 0.0
        %1612 = vmatpush.msra.mxu0 0.0
        %1613 = vmatpush.msra.mxu0 0.0
        %1614 = vmatpush.msra.mxu0 0.0
        %1615 = vmatpush.msra.mxu0 0.0
        %1616 = vmatpush.msra.mxu0 0.0
        %1617 = vmatpush.msra.mxu0 0.0
        %1618 = vmatpush.msra.mxu0 %v1597
        %1619 = vmatpush.msra.mxu0 %v1596
        %1620 = vmatpush.msra.mxu0 %v1595
        %1621 = vmatpush.msra.mxu0 %v1594
        %1622 = vmatmul.f32.gmra.mxu0 %v1604
        %v1623 = vpop.f32.mrf.mxu0
        %v1624 = vadd.f32 %v1601, %v1623
        %1625 = vdwg.mxu0
        %v1626 = vmul.f32 %v1624, 0.5
        %v1627 = vmul.f32 %v1624, %v1624
        %v1628 = vmul.f32 %v1627, %v1624
        %v1629 = vmul.f32 %v1628, 0.044715
        %v1630 = vadd.f32 %v1624, %v1629
        %v1631 = vmul.f32 %v1630, 0.7978846
        %v1632 = vtanh.pop %v1631
        %v1633 = vadd.f32 %v1632, 1.0
        %v1634 = vmul.f32 %v1626, %v1633
        %s1635 = scalar_lea.vmem %s12, 64
        %v1636 = vld [vmem:[%s1635] sm:$0xff]
        %v1637 = vld [vmem:[%s1635 + $0x8] sm:$0xff]
        %v1638 = vld [vmem:[%s1635 + $0x10] sm:$0xff]
        %v1639 = vld [vmem:[%s1635 + $0x18] sm:$0xff]
        %v1640 = vld [vmem:[%s1635 + $0x20] sm:$0xff]
        %v1641 = vld [vmem:[%s1635 + $0x28] sm:$0xff]
        %v1642 = vld [vmem:[%s1635 + $0x30] sm:$0xff]
        %v1643 = vld [vmem:[%s1635 + $0x38] sm:$0xff]
        %s1644 = scalar_lea.vmem %s13, 1
        %v1645 = vld [vmem:[%s1644] sm:$0x1]
        %v1647 = vperm.slane %v1645, 0
        %v1650 = vsel %vm1153, %v1634, 0
        %1652 = vmatpush.msra.mxu0 0.0
        %1653 = vmatpush.msra.mxu0 0.0
        %1654 = vmatpush.msra.mxu0 0.0
        %1655 = vmatpush.msra.mxu0 0.0
        %1656 = vmatpush.msra.mxu0 0.0
        %1657 = vmatpush.msra.mxu0 0.0
        %1658 = vmatpush.msra.mxu0 0.0
        %1659 = vmatpush.msra.mxu0 0.0
        %1660 = vmatpush.msra.mxu0 %v1643
        %1661 = vmatpush.msra.mxu0 %v1642
        %1662 = vmatpush.msra.mxu0 %v1641
        %1663 = vmatpush.msra.mxu0 %v1640
        %1664 = vmatpush.msra.mxu0 %v1639
        %1665 = vmatpush.msra.mxu0 %v1638
        %1666 = vmatpush.msra.mxu0 %v1637
        %1667 = vmatpush.msra.mxu0 %v1636
        %1668 = vmatmul.f32.gmra.mxu0 %v1650
        %v1669 = vpop.f32.mrf.mxu0
        %v1670 = vadd.f32 %v1647, %v1669
        %1671 = vdwg.mxu0
        %v1672 = vadd.f32 %v1670, %v1592
        %s1673 = scalar_lea.vmem %s14, 1
        %v1674 = vld [vmem:[%s1673] sm:$0x1]
        %s1675 = scalar_lea.vmem %s15, 1
        %v1676 = vld [vmem:[%s1675] sm:$0x1]
        %v1677 = vsel %vm680, %v1672, 0.0
        %1678 = vadd.xlane.f32.xlu0 %v1677
        %v1679 = vpop.xlane.xlu0 %1678
        %v1680 = vmul.f32 %v1679, %v690
        %v1681 = vsub.f32 %v1672, %v1680
        %v1682 = vmul.f32 %v1681, %v1681
        %v1683 = vsel %vm680, %v1682, 0.0
        %1684 = vadd.xlane.f32.xlu0 %v1683
        %v1685 = vpop.xlane.xlu0 %1684
        %v1686 = vmul.f32 %v1685, %v690
        %v1687 = vadd.f32 %v1686, 1e-12
        %v1688 = vrsqrt.pop %v1687
        %v1689 = vmul.f32 %v1688, %v1687
        %v1690 = vmul.f32 %v1689, %v1688
        %v1691 = vmul.f32 0.5, %v1690
        %v1692 = vsub.f32 1.5, %v1691
        %v1693 = vmul.f32 %v1688, %v1692
        %vm1694 = vweird.f32 %v1687
        %vm1695 = vweird.f32 %v1688
        %vm1696 = vmor %vm1694, %vm1695
        %v1697 = vsel %vm1696, %v1688, %v1693
        %v1698 = vmul.f32 %v1681, %v1697
        %v1700 = vperm.slane %v1674, 0
        %v1702 = vmul.f32 %v1698, %v1700
        %v1704 = vperm.slane %v1676, 0
        %v1706 = vadd.f32 %v1702, %v1704
        %v1707 = vld [vmem:[%s16] sm:$0xff]
        %v1708 = vld [vmem:[%s16 + $0x8] sm:$0xff]
        %v1709 = vld [vmem:[%s16 + $0x10] sm:$0xff]
        %v1710 = vld [vmem:[%s16 + $0x18] sm:$0xff]
        %v1711 = vld [vmem:[%s17] sm:$0x1]
        %v1713 = vsel %vm680, %v1706, 0
        %1715 = vmatpush.msra.mxu0 0.0
        %1716 = vmatpush.msra.mxu0 0.0
        %1717 = vmatpush.msra.mxu0 0.0
        %1718 = vmatpush.msra.mxu0 0.0
        %1719 = vmatpush.msra.mxu0 0.0
        %1720 = vmatpush.msra.mxu0 0.0
        %1721 = vmatpush.msra.mxu0 0.0
        %1722 = vmatpush.msra.mxu0 0.0
        %1723 = vmatpush.msra.mxu0 0.0
        %1724 = vmatpush.msra.mxu0 0.0
        %1725 = vmatpush.msra.mxu0 0.0
        %1726 = vmatpush.msra.mxu0 0.0
        %1727 = vmatpush.msra.mxu0 %v1710
        %1728 = vmatpush.msra.mxu0 %v1709
        %1729 = vmatpush.msra.mxu0 %v1708
        %1730 = vmatpush.msra.mxu0 %v1707
        %1731 = vmatmul.f32.gmra.mxu0 %v1713
        %v1732 = vpop.f32.mrf.mxu0
        %v1733 = vadd.f32 %v1711, %v1732
        %1734 = vdwg.mxu0
        %v1735 = vtanh.pop %v1733
        %v1736 = vld [vmem:[%s18] sm:$0xff]
        %v1737 = vld [vmem:[%s18 + $0x8] sm:$0xff]
        %v1738 = vld [vmem:[%s18 + $0x10] sm:$0xff]
        %v1739 = vld [vmem:[%s18 + $0x18] sm:$0xff]
        %v1740 = vld [vmem:[%s19] sm:$0x1]
        %v1742 = vperm.slane %v1740, 0
        %1744 = vmatpush.msra.mxu0 0.0
        %1745 = vmatpush.msra.mxu0 0.0
        %1746 = vmatpush.msra.mxu0 0.0
        %1747 = vmatpush.msra.mxu0 0.0
        %1748 = vmatpush.msra.mxu0 0.0
        %1749 = vmatpush.msra.mxu0 0.0
        %1750 = vmatpush.msra.mxu0 0.0
        %1751 = vmatpush.msra.mxu0 0.0
        %1752 = vmatpush.msra.mxu0 0.0
        %1753 = vmatpush.msra.mxu0 0.0
        %1754 = vmatpush.msra.mxu0 0.0
        %1755 = vmatpush.msra.mxu0 0.0
        %1756 = vmatpush.msra.mxu0 %v1739
        %1757 = vmatpush.msra.mxu0 %v1738
        %1758 = vmatpush.msra.mxu0 %v1737
        %1759 = vmatpush.msra.mxu0 %v1736
        %1760 = vmatmul.f32.gmra.mxu0 %v1713
        %v1761 = vpop.f32.mrf.mxu0
        %v1762 = vadd.f32 %v1742, %v1761
        %1763 = vdwg.mxu0
        %1764 = vst.msk [vmem:[%s662] sm:$0xff] %vm1033, %v1762
        %v1766 = vsel %vm680, %v1735, 0
        %1768 = vmatpush.msra.mxu0 0.0
        %1769 = vmatpush.msra.mxu0 0.0
        %1770 = vmatpush.msra.mxu0 0.0
        %1771 = vmatpush.msra.mxu0 0.0
        %1772 = vmatpush.msra.mxu0 0.0
        %1773 = vmatpush.msra.mxu0 0.0
        %1774 = vmatpush.msra.mxu0 0.0
        %1775 = vmatpush.msra.mxu0 0.0
        %1776 = vmatpush.msra.mxu0 0.0
        %1777 = vmatpush.msra.mxu0 0.0
        %1778 = vmatpush.msra.mxu0 0.0
        %1779 = vmatpush.msra.mxu0 0.0
        %1780 = vmatpush.msra.mxu0 %v1739
        %1781 = vmatpush.msra.mxu0 %v1738
        %1782 = vmatpush.msra.mxu0 %v1737
        %1783 = vmatpush.msra.mxu0 %v1736
        %1784 = vmatmul.f32.gmra.mxu0 %v1766
        %v1785 = vpop.f32.mrf.mxu0
        %v1786 = vadd.f32 %v1740, %v1785
        %1787 = vdwg.mxu0
        %vm1788 = vcmask 122880
        %1789 = vst.msk [vmem:[%s668] sm:$0x1] %vm1788, %v1786
        %s1790 = sand.u32 %s477, 1
        %s1791 = scalar_lea.sflag [#allocation3], %s1790
        %s1792 = sand.u32 %s477, 1
        %s1793 = smul.addr %s1792, 8
        %s1794 = scalar_lea.vmem [#allocation2], %s1793
        %s1795 = sand.u32 %s503, 1
        %s1796 = scalar_lea.sflag [#allocation5], %s1795
        %s1797 = sand.u32 %s503, 1
        %s1798 = scalar_lea.vmem [#allocation4], %s1797
        // Predicated region
        $region101: #{bert_encoder_forward.1} parent=99 // pred_check
          %p1799 = pneg %p487
        $region102: #{bert_encoder_forward.1} parent=99 // pred_check_branch
          %1801 = sbr.rel (%p1799) target = $region104
        $region103: #{bert_encoder_forward.1} parent=99 // pred_region
          %1803 = vsyncadd %s1791, 0
          %s1804 = smul.addr %s39, 8
          %s1805 = scalar_lea.hbm %s20, %s1804
          %s1807 = sshll.u32 %s1794, 4
          %s1808 = int_to_ptr.vmem [resolvable:$true] %s1807
          %s1809 = sshll.u32 %s1805, 4
          %s1810 = int_to_ptr.hbm [resolvable:$true] %s1809
          %1812 = dma.vmem_to_hbm [thread:$0]  %s1808, 128, %s1810, %s1791
        $region104: #{bert_encoder_forward.1} parent=99 // pred_fallthru
          _
        // Predicated region
        $region105: #{bert_encoder_forward.1} parent=99 // pred_check
          %p1813 = pneg %p513
        $region106: #{bert_encoder_forward.1} parent=99 // pred_check_branch
          %1815 = sbr.rel (%p1813) target = $region108
        $region107: #{bert_encoder_forward.1} parent=99 // pred_region
          %1817 = vsyncadd %s1796, 0
          %s1818 = scalar_lea.hbm %s21, %s39
          %s1820 = sshll.u32 %s1798, 4
          %s1821 = int_to_ptr.vmem [resolvable:$true] %s1820
          %s1822 = sshll.u32 %s1818, 4
          %s1823 = int_to_ptr.hbm [resolvable:$true] %s1822
          %1825 = dma.vmem_to_hbm [thread:$0]  %s1821, 16, %s1823, %s1796
        $region108: #{bert_encoder_forward.1} parent=99 // pred_fallthru
          _
      $region100: #{bert_encoder_forward.1} parent=5 // pred_fallthru
        _
      %p1826 = scmp.le.s32.totalorder 2, %s34
      // Predicated region
      $region109: #{bert_encoder_forward.1} parent=5 // pred_check
        %p1827 = pneg %p1826
      $region110: #{bert_encoder_forward.1} parent=5 // pred_check_branch
        %1829 = sbr.rel (%p1827) target = $region112
      $region111: #{bert_encoder_forward.1} parent=5 // pred_region
        %s1830 = ssub.s32 %s34, 2
        // Predicated region
        $region113: #{bert_encoder_forward.1} parent=111 // pred_check
          %p1831 = pneg %p493
        $region114: #{bert_encoder_forward.1} parent=111 // pred_check_branch
          %1833 = sbr.rel (%p1831) target = $region116
        $region115: #{bert_encoder_forward.1} parent=111 // pred_region
          %s1834 = sand.u32 %s478, 1
          %s1835 = scalar_lea.sflag [#allocation3], %s1834
          %s1836 = sand.u32 %s478, 1
          %s1837 = smul.addr %s1836, 8
          %s1838 = scalar_lea.vmem [#allocation2], %s1837
          %1840 = dma.done %s1835, 128
        $region116: #{bert_encoder_forward.1} parent=111 // pred_fallthru
          _
        // Predicated region
        $region117: #{bert_encoder_forward.1} parent=111 // pred_check
          %p1841 = pneg %p519
        $region118: #{bert_encoder_forward.1} parent=111 // pred_check_branch
          %1843 = sbr.rel (%p1841) target = $region120
        $region119: #{bert_encoder_forward.1} parent=111 // pred_region
          %s1844 = sand.u32 %s504, 1
          %s1845 = scalar_lea.sflag [#allocation5], %s1844
          %s1846 = sand.u32 %s504, 1
          %s1847 = scalar_lea.vmem [#allocation4], %s1846
          %1849 = dma.done %s1845, 16
        $region120: #{bert_encoder_forward.1} parent=111 // pred_fallthru
          _
      $region112: #{bert_encoder_forward.1} parent=5 // pred_fallthru
        _
    $region6: #{bert_encoder_forward.1} parent=1 // loop_footer
      %s38 = sadd.s32 1, %s34
    $region7: #{bert_encoder_forward.1} parent=1 // loop_footer_branch
      %33 = sbr.rel target = $region3
    $region8: #{bert_encoder_forward.1} parent=1 // loop_exit
      _
    %1850 = vsyncpa [#allocation3], 1
    %s1851 = scalar_lea.sflag [#allocation3], 1
    %1852 = vsyncpa %s1851, 1
    %1853 = vsyncpa [#allocation5], 1
    %s1854 = scalar_lea.sflag [#allocation5], 1
    %1855 = vsyncpa %s1854, 1

</llo_original>
